<compile_context>
chip_gen: v7x
topology: tpu7x:2x2x1
jax: 0.10.0
libtpu: 0.0.40
codegen_flags: <defaults>
</compile_context>

<pallas_src>
import jax
import jax.numpy as jnp
from jax.experimental import pallas as pl
from jax.experimental.pallas import tpu as pltpu


# ----------------------------------------------------------------------------
# Kernels
# ----------------------------------------------------------------------------
def _dense(h, w_ref):
    # bf16 weights are upcast in VMEM; accumulate in f32 on the MXU.
    return jnp.dot(h, w_ref[...].astype(jnp.float32),
                   preferred_element_type=jnp.float32)


def _critic_fwd_kernel(x_ref, u_ref,
                       w1s_ref, w1a_ref, b1_ref, w2_ref, b2_ref, w3p_ref,
                       w4s_ref, w4a_ref, b4_ref, w5_ref, b5_ref, w6p_ref,
                       b36_ref, q_ref):
    x = x_ref[...]
    u = u_ref[...]

    # ---- Q1 head: layer_1 -> relu -> layer_2 -> relu ----
    h1 = jnp.maximum(_dense(x, w1s_ref) + _dense(u, w1a_ref) + b1_ref[...], 0.0)
    h1 = jnp.maximum(_dense(h1, w2_ref) + b2_ref[...], 0.0)

    # ---- Q2 head: layer_4 -> relu -> layer_5 -> relu ----
    h2 = jnp.maximum(_dense(x, w4s_ref) + _dense(u, w4a_ref) + b4_ref[...], 0.0)
    h2 = jnp.maximum(_dense(h2, w5_ref) + b5_ref[...], 0.0)

    # ---- fused final layers: one dense (TB, 2) write; col0 = q1, col1 = q2 ----
    q = _dense(h1, w3p_ref) + _dense(h2, w6p_ref) + b36_ref[...]
    q_ref[...] = q.astype(q_ref.dtype)


def _critic_q1_kernel(x_ref, u_ref,
                      w1s_ref, w1a_ref, b1_ref, w2_ref, b2_ref, w3_ref, b3_ref,
                      q1_ref):
    x = x_ref[...]
    u = u_ref[...]
    h1 = jnp.maximum(_dense(x, w1s_ref) + _dense(u, w1a_ref) + b1_ref[...], 0.0)
    h1 = jnp.maximum(_dense(h1, w2_ref) + b2_ref[...], 0.0)
    q1 = _dense(h1, w3_ref) + b3_ref[...]
    q1_ref[...] = q1.astype(q1_ref.dtype)


# ----------------------------------------------------------------------------
# Wrappers
# ----------------------------------------------------------------------------
def _batch_tile(batch, max_tile=256):
    # Full batch if it fits in one tile, else 256 (multiple of 8 sublanes);
    # partial last tile is handled by Pallas masking.
    return batch if batch <= max_tile else max_tile


def _weight_spec(shape):
    # Same (full) block for every grid step -> stays resident in VMEM.
    return pl.BlockSpec(shape, lambda i, _n=len(shape): (0,) * _n)


def critic_forward(x, u, fused):
    """Pallas equivalent of Critic.forward(x, u) -> (q1, q2)."""
    batch, state_dim = x.shape
    action_dim = u.shape[1]
    tb = _batch_tile(batch)
    grid = (pl.cdiv(batch, tb),)

    w_names = ("w1s", "w1a", "b1", "w2", "b2", "w3p",
               "w4s", "w4a", "b4", "w5", "b5", "w6p", "b36")
    weights = [fused[k] for k in w_names]

    in_specs = ([pl.BlockSpec((tb, state_dim), lambda i: (i, 0)),
                 pl.BlockSpec((tb, action_dim), lambda i: (i, 0))]
                + [_weight_spec(w.shape) for w in weights])

    q12 = pl.pallas_call(
        _critic_fwd_kernel,
        out_shape=jax.ShapeDtypeStruct((batch, 2), jnp.float32),
        grid=grid,
        in_specs=in_specs,
        out_specs=pl.BlockSpec((tb, 2), lambda i: (i, 0)),
        compiler_params=pltpu.CompilerParams(
            dimension_semantics=("parallel",)),
    )(x, u, *weights)
    return q12[:, 0:1], q12[:, 1:2]


def critic_q1(x, u, fused):
    """Pallas equivalent of Critic.Q1(x, u) -> q1 (Q1 head only)."""
    batch, state_dim = x.shape
    action_dim = u.shape[1]
    tb = _batch_tile(batch)
    grid = (pl.cdiv(batch, tb),)

    w_names = ("w1s", "w1a", "b1", "w2", "b2", "w3", "b3")
    weights = [fused[k] for k in w_names]

    in_specs = ([pl.BlockSpec((tb, state_dim), lambda i: (i, 0)),
                 pl.BlockSpec((tb, action_dim), lambda i: (i, 0))]
                + [_weight_spec(w.shape) for w in weights])

    return pl.pallas_call(
        _critic_q1_kernel,
        out_shape=jax.ShapeDtypeStruct((batch, 1), jnp.float32),
        grid=grid,
        in_specs=in_specs,
        out_specs=pl.BlockSpec((tb, 1), lambda i: (i, 0)),
        compiler_params=pltpu.CompilerParams(
            dimension_semantics=("parallel",)),
    )(x, u, *weights)


# ----------------------------------------------------------------------------
# Parameters (PyTorch nn.Linear init: U(-1/sqrt(fan_in), 1/sqrt(fan_in)) for
# BOTH weight and bias). Weights stored transposed as [in, out], bias [1, out].
# ----------------------------------------------------------------------------
def init_params(key, state_dim, action_dim):
    in_dim = state_dim + action_dim
    layers = [
        ("w1", "b1", in_dim, 400),
        ("w2", "b2", 400, 300),
        ("w3", "b3", 300, 1),
        ("w4", "b4", in_dim, 400),
        ("w5", "b5", 400, 300),
        ("w6", "b6", 300, 1),
    ]
    params = {}
    keys = jax.random.split(key, 2 * len(layers))
    for idx, (wn, bn, fan_in, fan_out) in enumerate(layers):
        bound = 1.0 / jnp.sqrt(jnp.float32(fan_in))
        params[wn] = jax.random.uniform(keys[2 * idx], (fan_in, fan_out),
                                        dtype=jnp.float32,
                                        minval=-bound, maxval=bound)
        params[bn] = jax.random.uniform(keys[2 * idx + 1], (1, fan_out),
                                        dtype=jnp.float32,
                                        minval=-bound, maxval=bound)
    return params


def fuse_params(params, state_dim, weight_dtype=jnp.bfloat16):
    """One-time host-side prep: split layer-1/4 over state/action, pad the
    (300,1) output weights to dense (300,2) columns, cast weights to bf16."""
    s = state_dim
    wc = lambda w: w.astype(weight_dtype)
    zcol = jnp.zeros((300, 1), jnp.float32)
    return {
        # Q1 head
        "w1s": wc(params["w1"][:s]), "w1a": wc(params["w1"][s:]),
        "b1": params["b1"],
        "w2": wc(params["w2"]), "b2": params["b2"],
        "w3": wc(params["w3"]), "b3": params["b3"],
        "w3p": wc(jnp.concatenate([params["w3"], zcol], axis=1)),
        # Q2 head
        "w4s": wc(params["w4"][:s]), "w4a": wc(params["w4"][s:]),
        "b4": params["b4"],
        "w5": wc(params["w5"]), "b5": params["b5"],
        "w6p": wc(jnp.concatenate([zcol, params["w6"]], axis=1)),
        "b36": jnp.concatenate([params["b3"], params["b6"]], axis=1),
    }


# ----------------------------------------------------------------------------
if __name__ == "__main__":
    state_dim, action_dim, batch = 16, 8, 4

    root = jax.random.PRNGKey(0)
    k_p, k_x, k_u = jax.random.split(root, 3)

    params = init_params(k_p, state_dim, action_dim)
    fused = fuse_params(params, state_dim)

    x = jax.random.normal(k_x, (batch, state_dim), dtype=jnp.float32)
    u = jax.random.normal(k_u, (batch, action_dim), dtype=jnp.float32)

    q1, q2 = critic_forward(x, u, fused)
    q1_only = critic_q1(x, u, fused)
    jax.block_until_ready((q1, q2, q1_only))

    # Pure-JAX reference using the same bf16-quantized weights (f32 math).
    qw = lambda w: w.astype(jnp.bfloat16).astype(jnp.float32)
    xu = jnp.concatenate([x, u], axis=1)
    h1 = jnp.maximum(xu @ qw(params["w1"]) + params["b1"], 0.0)
    h1 = jnp.maximum(h1 @ qw(params["w2"]) + params["b2"], 0.0)
    r1 = h1 @ qw(params["w3"]) + params["b3"]
    h2 = jnp.maximum(xu @ qw(params["w4"]) + params["b4"], 0.0)
    h2 = jnp.maximum(h2 @ qw(params["w5"]) + params["b5"], 0.0)
    r2 = h2 @ qw(params["w6"]) + params["b6"]

    assert q1.shape == (batch, 1) and q2.shape == (batch, 1)
    assert q1_only.shape == (batch, 1)
    assert jnp.allclose(q1, r1, atol=2e-2, rtol=2e-2)
    assert jnp.allclose(q2, r2, atol=2e-2, rtol=2e-2)
    assert jnp.allclose(q1_only, r1, atol=2e-2, rtol=2e-2)

    print("KERNEL_OK")
</pallas_src>

<mosaic_0001>
module attributes {stable_mosaic.version = 11 : i64} {
  func.func @_critic_fwd_kernel(%arg0: i32, %arg1: memref<4x16xf32, #tpu.memory_space<vmem>>, %arg2: memref<4x8xf32, #tpu.memory_space<vmem>>, %arg3: memref<16x400xbf16, #tpu.memory_space<vmem>>, %arg4: memref<8x400xbf16, #tpu.memory_space<vmem>>, %arg5: memref<1x400xf32, #tpu.memory_space<vmem>>, %arg6: memref<400x300xbf16, #tpu.memory_space<vmem>>, %arg7: memref<1x300xf32, #tpu.memory_space<vmem>>, %arg8: memref<300x2xbf16, #tpu.memory_space<vmem>>, %arg9: memref<16x400xbf16, #tpu.memory_space<vmem>>, %arg10: memref<8x400xbf16, #tpu.memory_space<vmem>>, %arg11: memref<1x400xf32, #tpu.memory_space<vmem>>, %arg12: memref<400x300xbf16, #tpu.memory_space<vmem>>, %arg13: memref<1x300xf32, #tpu.memory_space<vmem>>, %arg14: memref<300x2xbf16, #tpu.memory_space<vmem>>, %arg15: memref<1x2xf32, #tpu.memory_space<vmem>>, %arg16: memref<4x2xf32, #tpu.memory_space<vmem>>) attributes {dimension_semantics = [#tpu.dimension_semantics<parallel>], iteration_bounds = array<i64: 1>, scalar_prefetch = 0 : i64, scratch_operands = 0 : i64, tpu.core_type = #tpu.core_type<tc>, window_params = [{transform_indices = @transform_0, window_bounds = array<i64: 4, 16>}, {transform_indices = @transform_1, window_bounds = array<i64: 4, 8>}, {pipeline_mode = #tpu.pipeline_mode<synchronous>, transform_indices = @transform_2, window_bounds = array<i64: 16, 400>}, {pipeline_mode = #tpu.pipeline_mode<synchronous>, transform_indices = @transform_3, window_bounds = array<i64: 8, 400>}, {pipeline_mode = #tpu.pipeline_mode<synchronous>, transform_indices = @transform_4, window_bounds = array<i64: 1, 400>}, {pipeline_mode = #tpu.pipeline_mode<synchronous>, transform_indices = @transform_5, window_bounds = array<i64: 400, 300>}, {pipeline_mode = #tpu.pipeline_mode<synchronous>, transform_indices = @transform_6, window_bounds = array<i64: 1, 300>}, {pipeline_mode = #tpu.pipeline_mode<synchronous>, transform_indices = @transform_7, window_bounds = array<i64: 300, 2>}, {pipeline_mode = #tpu.pipeline_mode<synchronous>, transform_indices = @transform_8, window_bounds = array<i64: 16, 400>}, {pipeline_mode = #tpu.pipeline_mode<synchronous>, transform_indices = @transform_9, window_bounds = array<i64: 8, 400>}, {pipeline_mode = #tpu.pipeline_mode<synchronous>, transform_indices = @transform_10, window_bounds = array<i64: 1, 400>}, {pipeline_mode = #tpu.pipeline_mode<synchronous>, transform_indices = @transform_11, window_bounds = array<i64: 400, 300>}, {pipeline_mode = #tpu.pipeline_mode<synchronous>, transform_indices = @transform_12, window_bounds = array<i64: 1, 300>}, {pipeline_mode = #tpu.pipeline_mode<synchronous>, transform_indices = @transform_13, window_bounds = array<i64: 300, 2>}, {pipeline_mode = #tpu.pipeline_mode<synchronous>, transform_indices = @transform_14, window_bounds = array<i64: 1, 2>}, {transform_indices = @transform_15, window_bounds = array<i64: 4, 2>}]} {
    %c0 = arith.constant 0 : index
    %c0_0 = arith.constant 0 : index
    %0 = vector.load %arg1[%c0, %c0_0] : memref<4x16xf32, #tpu.memory_space<vmem>>, vector<4x16xf32>
    %c0_1 = arith.constant 0 : index
    %c0_2 = arith.constant 0 : index
    %1 = vector.load %arg2[%c0_1, %c0_2] : memref<4x8xf32, #tpu.memory_space<vmem>>, vector<4x8xf32>
    %c0_3 = arith.constant 0 : index
    %c0_4 = arith.constant 0 : index
    %2 = vector.load %arg3[%c0_3, %c0_4] : memref<16x400xbf16, #tpu.memory_space<vmem>>, vector<16x400xbf16>
    %3 = arith.extf %2 : vector<16x400xbf16> to vector<16x400xf32>
    %cst = arith.constant dense<0.000000e+00> : vector<4x400xf32>
    %4 = tpu.matmul %0, %3, %cst {dimension_numbers = #tpu.dot_dimension_numbers<[1], [0], [0], [1], [0, 0, 1, 1], [], []>} : vector<4x16xf32>, vector<16x400xf32>, vector<4x400xf32> -> vector<4x400xf32>
    %c0_5 = arith.constant 0 : index
    %c0_6 = arith.constant 0 : index
    %5 = vector.load %arg4[%c0_5, %c0_6] : memref<8x400xbf16, #tpu.memory_space<vmem>>, vector<8x400xbf16>
    %6 = arith.extf %5 : vector<8x400xbf16> to vector<8x400xf32>
    %cst_7 = arith.constant dense<0.000000e+00> : vector<4x400xf32>
    %7 = tpu.matmul %1, %6, %cst_7 {dimension_numbers = #tpu.dot_dimension_numbers<[1], [0], [0], [1], [0, 0, 1, 1], [], []>} : vector<4x8xf32>, vector<8x400xf32>, vector<4x400xf32> -> vector<4x400xf32>
    %8 = arith.addf %4, %7 : vector<4x400xf32>
    %c0_8 = arith.constant 0 : index
    %c0_9 = arith.constant 0 : index
    %9 = vector.load %arg5[%c0_8, %c0_9] : memref<1x400xf32, #tpu.memory_space<vmem>>, vector<1x400xf32>
    %10 = vector.broadcast %9 : vector<1x400xf32> to vector<4x400xf32>
    %11 = arith.addf %8, %10 : vector<4x400xf32>
    %cst_10 = arith.constant 0.000000e+00 : f32
    %12 = vector.broadcast %cst_10 : f32 to vector<4x400xf32>
    %13 = arith.maximumf %11, %12 : vector<4x400xf32>
    %c0_11 = arith.constant 0 : index
    %c0_12 = arith.constant 0 : index
    %14 = vector.load %arg6[%c0_11, %c0_12] : memref<400x300xbf16, #tpu.memory_space<vmem>>, vector<400x300xbf16>
    %15 = arith.extf %14 : vector<400x300xbf16> to vector<400x300xf32>
    %cst_13 = arith.constant dense<0.000000e+00> : vector<4x300xf32>
    %16 = tpu.matmul %13, %15, %cst_13 {dimension_numbers = #tpu.dot_dimension_numbers<[1], [0], [0], [1], [0, 0, 1, 1], [], []>} : vector<4x400xf32>, vector<400x300xf32>, vector<4x300xf32> -> vector<4x300xf32>
    %c0_14 = arith.constant 0 : index
    %c0_15 = arith.constant 0 : index
    %17 = vector.load %arg7[%c0_14, %c0_15] : memref<1x300xf32, #tpu.memory_space<vmem>>, vector<1x300xf32>
    %18 = vector.broadcast %17 : vector<1x300xf32> to vector<4x300xf32>
    %19 = arith.addf %16, %18 : vector<4x300xf32>
    %cst_16 = arith.constant 0.000000e+00 : f32
    %20 = vector.broadcast %cst_16 : f32 to vector<4x300xf32>
    %21 = arith.maximumf %19, %20 : vector<4x300xf32>
    %c0_17 = arith.constant 0 : index
    %c0_18 = arith.constant 0 : index
    %22 = vector.load %arg9[%c0_17, %c0_18] : memref<16x400xbf16, #tpu.memory_space<vmem>>, vector<16x400xbf16>
    %23 = arith.extf %22 : vector<16x400xbf16> to vector<16x400xf32>
    %cst_19 = arith.constant dense<0.000000e+00> : vector<4x400xf32>
    %24 = tpu.matmul %0, %23, %cst_19 {dimension_numbers = #tpu.dot_dimension_numbers<[1], [0], [0], [1], [0, 0, 1, 1], [], []>} : vector<4x16xf32>, vector<16x400xf32>, vector<4x400xf32> -> vector<4x400xf32>
    %c0_20 = arith.constant 0 : index
    %c0_21 = arith.constant 0 : index
    %25 = vector.load %arg10[%c0_20, %c0_21] : memref<8x400xbf16, #tpu.memory_space<vmem>>, vector<8x400xbf16>
    %26 = arith.extf %25 : vector<8x400xbf16> to vector<8x400xf32>
    %cst_22 = arith.constant dense<0.000000e+00> : vector<4x400xf32>
    %27 = tpu.matmul %1, %26, %cst_22 {dimension_numbers = #tpu.dot_dimension_numbers<[1], [0], [0], [1], [0, 0, 1, 1], [], []>} : vector<4x8xf32>, vector<8x400xf32>, vector<4x400xf32> -> vector<4x400xf32>
    %28 = arith.addf %24, %27 : vector<4x400xf32>
    %c0_23 = arith.constant 0 : index
    %c0_24 = arith.constant 0 : index
    %29 = vector.load %arg11[%c0_23, %c0_24] : memref<1x400xf32, #tpu.memory_space<vmem>>, vector<1x400xf32>
    %30 = vector.broadcast %29 : vector<1x400xf32> to vector<4x400xf32>
    %31 = arith.addf %28, %30 : vector<4x400xf32>
    %cst_25 = arith.constant 0.000000e+00 : f32
    %32 = vector.broadcast %cst_25 : f32 to vector<4x400xf32>
    %33 = arith.maximumf %31, %32 : vector<4x400xf32>
    %c0_26 = arith.constant 0 : index
    %c0_27 = arith.constant 0 : index
    %34 = vector.load %arg12[%c0_26, %c0_27] : memref<400x300xbf16, #tpu.memory_space<vmem>>, vector<400x300xbf16>
    %35 = arith.extf %34 : vector<400x300xbf16> to vector<400x300xf32>
    %cst_28 = arith.constant dense<0.000000e+00> : vector<4x300xf32>
    %36 = tpu.matmul %33, %35, %cst_28 {dimension_numbers = #tpu.dot_dimension_numbers<[1], [0], [0], [1], [0, 0, 1, 1], [], []>} : vector<4x400xf32>, vector<400x300xf32>, vector<4x300xf32> -> vector<4x300xf32>
    %c0_29 = arith.constant 0 : index
    %c0_30 = arith.constant 0 : index
    %37 = vector.load %arg13[%c0_29, %c0_30] : memref<1x300xf32, #tpu.memory_space<vmem>>, vector<1x300xf32>
    %38 = vector.broadcast %37 : vector<1x300xf32> to vector<4x300xf32>
    %39 = arith.addf %36, %38 : vector<4x300xf32>
    %cst_31 = arith.constant 0.000000e+00 : f32
    %40 = vector.broadcast %cst_31 : f32 to vector<4x300xf32>
    %41 = arith.maximumf %39, %40 : vector<4x300xf32>
    %c0_32 = arith.constant 0 : index
    %c0_33 = arith.constant 0 : index
    %42 = vector.load %arg8[%c0_32, %c0_33] : memref<300x2xbf16, #tpu.memory_space<vmem>>, vector<300x2xbf16>
    %43 = arith.extf %42 : vector<300x2xbf16> to vector<300x2xf32>
    %cst_34 = arith.constant dense<0.000000e+00> : vector<4x2xf32>
    %44 = tpu.matmul %21, %43, %cst_34 {dimension_numbers = #tpu.dot_dimension_numbers<[1], [0], [0], [1], [0, 0, 1, 1], [], []>} : vector<4x300xf32>, vector<300x2xf32>, vector<4x2xf32> -> vector<4x2xf32>
    %c0_35 = arith.constant 0 : index
    %c0_36 = arith.constant 0 : index
    %45 = vector.load %arg14[%c0_35, %c0_36] : memref<300x2xbf16, #tpu.memory_space<vmem>>, vector<300x2xbf16>
    %46 = arith.extf %45 : vector<300x2xbf16> to vector<300x2xf32>
    %cst_37 = arith.constant dense<0.000000e+00> : vector<4x2xf32>
    %47 = tpu.matmul %41, %46, %cst_37 {dimension_numbers = #tpu.dot_dimension_numbers<[1], [0], [0], [1], [0, 0, 1, 1], [], []>} : vector<4x300xf32>, vector<300x2xf32>, vector<4x2xf32> -> vector<4x2xf32>
    %48 = arith.addf %44, %47 : vector<4x2xf32>
    %c0_38 = arith.constant 0 : index
    %c0_39 = arith.constant 0 : index
    %49 = vector.load %arg15[%c0_38, %c0_39] : memref<1x2xf32, #tpu.memory_space<vmem>>, vector<1x2xf32>
    %50 = vector.broadcast %49 : vector<1x2xf32> to vector<4x2xf32>
    %51 = arith.addf %48, %50 : vector<4x2xf32>
    %c0_40 = arith.constant 0 : index
    %c0_41 = arith.constant 0 : index
    %52 = vector.load %arg16[%c0_40, %c0_41] : memref<4x2xf32, #tpu.memory_space<vmem>>, vector<4x2xf32>
    tpu.vector_store %arg16[%c0_40, %c0_41], %51 {strides = array<i32>} : memref<4x2xf32, #tpu.memory_space<vmem>>, vector<4x2xf32>,
    return
  }
  func.func @transform_0(%arg0: i32) -> (i32, i32) {
    %c0_i32 = arith.constant 0 : i32
    %c0_i32_0 = arith.constant 0 : i32
    return %arg0, %c0_i32 : i32, i32
  }
  func.func @transform_1(%arg0: i32) -> (i32, i32) {
    %c0_i32 = arith.constant 0 : i32
    %c0_i32_0 = arith.constant 0 : i32
    return %arg0, %c0_i32 : i32, i32
  }
  func.func @transform_2(%arg0: i32) -> (i32, i32) {
    %c0_i32 = arith.constant 0 : i32
    %c0_i32_0 = arith.constant 0 : i32
    %c0_i32_1 = arith.constant 0 : i32
    return %c0_i32, %c0_i32_0 : i32, i32
  }
  func.func @transform_3(%arg0: i32) -> (i32, i32) {
    %c0_i32 = arith.constant 0 : i32
    %c0_i32_0 = arith.constant 0 : i32
    %c0_i32_1 = arith.constant 0 : i32
    return %c0_i32, %c0_i32_0 : i32, i32
  }
  func.func @transform_4(%arg0: i32) -> (i32, i32) {
    %c0_i32 = arith.constant 0 : i32
    %c0_i32_0 = arith.constant 0 : i32
    %c0_i32_1 = arith.constant 0 : i32
    return %c0_i32, %c0_i32_0 : i32, i32
  }
  func.func @transform_5(%arg0: i32) -> (i32, i32) {
    %c0_i32 = arith.constant 0 : i32
    %c0_i32_0 = arith.constant 0 : i32
    %c0_i32_1 = arith.constant 0 : i32
    return %c0_i32, %c0_i32_0 : i32, i32
  }
  func.func @transform_6(%arg0: i32) -> (i32, i32) {
    %c0_i32 = arith.constant 0 : i32
    %c0_i32_0 = arith.constant 0 : i32
    %c0_i32_1 = arith.constant 0 : i32
    return %c0_i32, %c0_i32_0 : i32, i32
  }
  func.func @transform_7(%arg0: i32) -> (i32, i32) {
    %c0_i32 = arith.constant 0 : i32
    %c0_i32_0 = arith.constant 0 : i32
    %c0_i32_1 = arith.constant 0 : i32
    return %c0_i32, %c0_i32_0 : i32, i32
  }
  func.func @transform_8(%arg0: i32) -> (i32, i32) {
    %c0_i32 = arith.constant 0 : i32
    %c0_i32_0 = arith.constant 0 : i32
    %c0_i32_1 = arith.constant 0 : i32
    return %c0_i32, %c0_i32_0 : i32, i32
  }
  func.func @transform_9(%arg0: i32) -> (i32, i32) {
    %c0_i32 = arith.constant 0 : i32
    %c0_i32_0 = arith.constant 0 : i32
    %c0_i32_1 = arith.constant 0 : i32
    return %c0_i32, %c0_i32_0 : i32, i32
  }
  func.func @transform_10(%arg0: i32) -> (i32, i32) {
    %c0_i32 = arith.constant 0 : i32
    %c0_i32_0 = arith.constant 0 : i32
    %c0_i32_1 = arith.constant 0 : i32
    return %c0_i32, %c0_i32_0 : i32, i32
  }
  func.func @transform_11(%arg0: i32) -> (i32, i32) {
    %c0_i32 = arith.constant 0 : i32
    %c0_i32_0 = arith.constant 0 : i32
    %c0_i32_1 = arith.constant 0 : i32
    return %c0_i32, %c0_i32_0 : i32, i32
  }
  func.func @transform_12(%arg0: i32) -> (i32, i32) {
    %c0_i32 = arith.constant 0 : i32
    %c0_i32_0 = arith.constant 0 : i32
    %c0_i32_1 = arith.constant 0 : i32
    return %c0_i32, %c0_i32_0 : i32, i32
  }
  func.func @transform_13(%arg0: i32) -> (i32, i32) {
    %c0_i32 = arith.constant 0 : i32
    %c0_i32_0 = arith.constant 0 : i32
    %c0_i32_1 = arith.constant 0 : i32
    return %c0_i32, %c0_i32_0 : i32, i32
  }
  func.func @transform_14(%arg0: i32) -> (i32, i32) {
    %c0_i32 = arith.constant 0 : i32
    %c0_i32_0 = arith.constant 0 : i32
    %c0_i32_1 = arith.constant 0 : i32
    return %c0_i32, %c0_i32_0 : i32, i32
  }
  func.func @transform_15(%arg0: i32) -> (i32, i32) {
    %c0_i32 = arith.constant 0 : i32
    %c0_i32_0 = arith.constant 0 : i32
    return %arg0, %c0_i32 : i32, i32
  }
}

</mosaic_0001>

<llo_original>
// kernel: tpu_custom_call.1
$region0: #{tpu_custom_call.1}
  #allocation0 [shape = 'u32[]', space=smem, size = 0x4, offset = 0x4, fixed_abs, tag = 'smem constant byte address 0x4 - core index']
  #allocation1 [shape = 'u32[144,128]{1,0:T(1,128)}', space=vmem, size = 0x12000, scoped, tag = 'internal scratch']
  %s0 = inlined_call_operand.vmem [shape: f32[4,16], index: 0, kind: input, shape index: {}]
  %s1 = inlined_call_operand.vmem [shape: f32[4,8], index: 1, kind: input, shape index: {}]
  %s2 = inlined_call_operand.vmem [shape: bf16[16,400], index: 2, kind: input, shape index: {}]
  %s3 = inlined_call_operand.vmem [shape: bf16[8,400], index: 3, kind: input, shape index: {}]
  %s4 = inlined_call_operand.vmem [shape: f32[1,400], index: 4, kind: input, shape index: {}]
  %s5 = inlined_call_operand.hbm [shape: bf16[400,300], index: 5, kind: input, shape index: {}]
  %s6 = inlined_call_operand.vmem [shape: f32[1,300], index: 6, kind: input, shape index: {}]
  %s7 = inlined_call_operand.vmem [shape: bf16[300,2], index: 7, kind: input, shape index: {}]
  %s8 = inlined_call_operand.vmem [shape: bf16[16,400], index: 8, kind: input, shape index: {}]
  %s9 = inlined_call_operand.vmem [shape: bf16[8,400], index: 9, kind: input, shape index: {}]
  %s10 = inlined_call_operand.vmem [shape: f32[1,400], index: 10, kind: input, shape index: {}]
  %s11 = inlined_call_operand.hbm [shape: bf16[400,300], index: 11, kind: input, shape index: {}]
  %s12 = inlined_call_operand.vmem [shape: f32[1,300], index: 12, kind: input, shape index: {}]
  %s13 = inlined_call_operand.vmem [shape: bf16[300,2], index: 13, kind: input, shape index: {}]
  %s14 = inlined_call_operand.vmem [shape: f32[1,2], index: 14, kind: input, shape index: {}]
  %s15 = inlined_call_operand.vmem [shape: f32[4,2], index: 15, kind: output, shape index: {}]
  %s16 = sld [smem:[#allocation0]]
  $region78: #{tpu_custom_call.1} parent=0
    _
  %s18 = ssub.s32 1, %s16
  %s19 = scalar_select 0, %s18, %s16
  $region1: #{tpu_custom_call.1} parent=0
    #allocation2 [shape = 'u8[307200]{0}', space=vmem, size = 0x4b000, scoped, tag = 'input window, operand 5, single buffered']
    #allocation3 [shape = 's32[1]{0}', space=sflag, size = 0x4, scoped, tag = 'scoped memory for tpu_custom_call.1']
    #allocation4 [shape = 'u8[307200]{0}', space=vmem, size = 0x4b000, scoped, tag = 'input window, operand 11, single buffered']
    #allocation5 [shape = 's32[1]{0}', space=sflag, size = 0x4, scoped, tag = 'scoped memory for tpu_custom_call.1']
    %20 = vsyncpa [#allocation3], 0
    %21 = vsyncpa [#allocation5], 0
    // Predicated region
    $region2: #{tpu_custom_call.1} parent=1 // pred_check
      _
    $region3: #{tpu_custom_call.1} parent=1 // pred_check_branch
      %23 = sbr.rel (0) target = $region5
    $region4: #{tpu_custom_call.1} parent=1 // pred_region
      _
    $region5: #{tpu_custom_call.1} parent=1 // pred_fallthru
      _
    // Predicated region
    $region6: #{tpu_custom_call.1} parent=1 // pred_check
      _
    $region7: #{tpu_custom_call.1} parent=1 // pred_check_branch
      %25 = sbr.rel (0) target = $region9
    $region8: #{tpu_custom_call.1} parent=1 // pred_region
      _
    $region9: #{tpu_custom_call.1} parent=1 // pred_fallthru
      _
    // Predicated region
    $region10: #{tpu_custom_call.1} parent=1 // pred_check
      _
    $region11: #{tpu_custom_call.1} parent=1 // pred_check_branch
      %27 = sbr.rel (0) target = $region13
    $region12: #{tpu_custom_call.1} parent=1 // pred_region
      _
    $region13: #{tpu_custom_call.1} parent=1 // pred_fallthru
      _
    // Predicated region
    $region14: #{tpu_custom_call.1} parent=1 // pred_check
      _
    $region15: #{tpu_custom_call.1} parent=1 // pred_check_branch
      %29 = sbr.rel (0) target = $region17
    $region16: #{tpu_custom_call.1} parent=1 // pred_region
      _
    $region17: #{tpu_custom_call.1} parent=1 // pred_fallthru
      _
    // Predicated region
    $region18: #{tpu_custom_call.1} parent=1 // pred_check
      _
    $region19: #{tpu_custom_call.1} parent=1 // pred_check_branch
      %31 = sbr.rel (0) target = $region21
    $region20: #{tpu_custom_call.1} parent=1 // pred_region
      _
    $region21: #{tpu_custom_call.1} parent=1 // pred_fallthru
      _
    // Predicated region
    $region22: #{tpu_custom_call.1} parent=1 // pred_check
      _
    $region23: #{tpu_custom_call.1} parent=1 // pred_check_branch
      %33 = sbr.rel (0) target = $region25
    $region24: #{tpu_custom_call.1} parent=1 // pred_region
      %s35 = ssub.s32 9600, 9600
      %36 = vsyncadd [#allocation3], %s35
      %s37 = sshll.u32 [#allocation2], 4
      %s38 = int_to_ptr.vmem [resolvable:$true] %s37
      %43 = dma.hbm_to_vmem [thread:$0]  %s5, 9600, %s38, [#allocation3], 192, 192, 12
    $region25: #{tpu_custom_call.1} parent=1 // pred_fallthru
      _
    // Predicated region
    $region26: #{tpu_custom_call.1} parent=1 // pred_check
      _
    $region27: #{tpu_custom_call.1} parent=1 // pred_check_branch
      %45 = sbr.rel (0) target = $region29
    $region28: #{tpu_custom_call.1} parent=1 // pred_region
      _
    $region29: #{tpu_custom_call.1} parent=1 // pred_fallthru
      _
    // Predicated region
    $region30: #{tpu_custom_call.1} parent=1 // pred_check
      _
    $region31: #{tpu_custom_call.1} parent=1 // pred_check_branch
      %47 = sbr.rel (0) target = $region33
    $region32: #{tpu_custom_call.1} parent=1 // pred_region
      _
    $region33: #{tpu_custom_call.1} parent=1 // pred_fallthru
      _
    // Predicated region
    $region34: #{tpu_custom_call.1} parent=1 // pred_check
      _
    $region35: #{tpu_custom_call.1} parent=1 // pred_check_branch
      %49 = sbr.rel (0) target = $region37
    $region36: #{tpu_custom_call.1} parent=1 // pred_region
      _
    $region37: #{tpu_custom_call.1} parent=1 // pred_fallthru
      _
    // Predicated region
    $region38: #{tpu_custom_call.1} parent=1 // pred_check
      _
    $region39: #{tpu_custom_call.1} parent=1 // pred_check_branch
      %51 = sbr.rel (0) target = $region41
    $region40: #{tpu_custom_call.1} parent=1 // pred_region
      _
    $region41: #{tpu_custom_call.1} parent=1 // pred_fallthru
      _
    // Predicated region
    $region42: #{tpu_custom_call.1} parent=1 // pred_check
      _
    $region43: #{tpu_custom_call.1} parent=1 // pred_check_branch
      %53 = sbr.rel (0) target = $region45
    $region44: #{tpu_custom_call.1} parent=1 // pred_region
      _
    $region45: #{tpu_custom_call.1} parent=1 // pred_fallthru
      _
    // Predicated region
    $region46: #{tpu_custom_call.1} parent=1 // pred_check
      _
    $region47: #{tpu_custom_call.1} parent=1 // pred_check_branch
      %55 = sbr.rel (0) target = $region49
    $region48: #{tpu_custom_call.1} parent=1 // pred_region
      %s57 = ssub.s32 9600, 9600
      %58 = vsyncadd [#allocation5], %s57
      %s59 = sshll.u32 [#allocation4], 4
      %s60 = int_to_ptr.vmem [resolvable:$true] %s59
      %65 = dma.hbm_to_vmem [thread:$0]  %s11, 9600, %s60, [#allocation5], 192, 192, 12
    $region49: #{tpu_custom_call.1} parent=1 // pred_fallthru
      _
    // Predicated region
    $region50: #{tpu_custom_call.1} parent=1 // pred_check
      _
    $region51: #{tpu_custom_call.1} parent=1 // pred_check_branch
      %67 = sbr.rel (0) target = $region53
    $region52: #{tpu_custom_call.1} parent=1 // pred_region
      _
    $region53: #{tpu_custom_call.1} parent=1 // pred_fallthru
      _
    // Predicated region
    $region54: #{tpu_custom_call.1} parent=1 // pred_check
      _
    $region55: #{tpu_custom_call.1} parent=1 // pred_check_branch
      %69 = sbr.rel (0) target = $region57
    $region56: #{tpu_custom_call.1} parent=1 // pred_region
      _
    $region57: #{tpu_custom_call.1} parent=1 // pred_fallthru
      _
    // Predicated region
    $region58: #{tpu_custom_call.1} parent=1 // pred_check
      _
    $region59: #{tpu_custom_call.1} parent=1 // pred_check_branch
      %71 = sbr.rel (0) target = $region61
    $region60: #{tpu_custom_call.1} parent=1 // pred_region
      _
    $region61: #{tpu_custom_call.1} parent=1 // pred_fallthru
      _
    // Predicated region
    $region62: #{tpu_custom_call.1} parent=1 // pred_check
      _
    $region63: #{tpu_custom_call.1} parent=1 // pred_check_branch
      %73 = sbr.rel (0) target = $region65
    $region64: #{tpu_custom_call.1} parent=1 // pred_region
      %74 = dma.done [#allocation3], 9600
    $region65: #{tpu_custom_call.1} parent=1 // pred_fallthru
      _
    // Predicated region
    $region66: #{tpu_custom_call.1} parent=1 // pred_check
      _
    $region67: #{tpu_custom_call.1} parent=1 // pred_check_branch
      %76 = sbr.rel (0) target = $region69
    $region68: #{tpu_custom_call.1} parent=1 // pred_region
      %77 = dma.done [#allocation5], 9600
    $region69: #{tpu_custom_call.1} parent=1 // pred_fallthru
      _
    %v78 = vld [vmem:[%s0] sm:$0xf]
    %v79 = vld [vmem:[%s1] sm:$0xf]
    %v80 = vld [vmem:[%s2] sm:$0xff]
    %v81 = vld [vmem:[%s2 + $0x8] sm:$0xff]
    %v82 = vld [vmem:[%s2 + $0x10] sm:$0xff]
    %v83 = vld [vmem:[%s2 + $0x18] sm:$0xff]
    %v84 = vunpack.c.l.bf16 %v80
    %v85 = vunpack.c.h.bf16 %v80
    %v86 = vunpack.c.l.bf16 %v81
    %v87 = vunpack.c.h.bf16 %v81
    %v88 = vunpack.c.l.bf16 %v82
    %v89 = vunpack.c.h.bf16 %v82
    %v90 = vunpack.c.l.bf16 %v83
    %v91 = vunpack.c.h.bf16 %v83
    %v92 = vld [vmem:[%s3] sm:$0xff]
    %v93 = vld [vmem:[%s3 + $0x8] sm:$0xff]
    %v94 = vunpack.c.l.bf16 %v92
    %v95 = vunpack.c.h.bf16 %v92
    %v96 = vunpack.c.l.bf16 %v93
    %v97 = vunpack.c.h.bf16 %v93
    %vm98 = vcmask 64512
    %v100 = vsel %vm98, %v79, 0
    %102 = vmatprep.subr.mxu0 %v95
    %103 = vmatpush1.msra.mxu0 %v94
    %104 = vmatprep.subr.mxu0 0.0
    %105 = vmatpush1.msra.mxu0 0.0
    %106 = vmatprep.subr.mxu0 0.0
    %107 = vmatpush1.msra.mxu0 0.0
    %108 = vmatprep.subr.mxu0 0.0
    %109 = vmatpush1.msra.mxu0 0.0
    %110 = vmatprep.subr.mxu0 0.0
    %111 = vmatpush1.msra.mxu0 0.0
    %112 = vmatprep.subr.mxu0 0.0
    %113 = vmatpush1.msra.mxu0 0.0
    %114 = vmatprep.subr.mxu0 0.0
    %115 = vmatpush1.msra.mxu0 0.0
    %116 = vmatprep.subr.mxu0 0.0
    %117 = vmatpush1.msra.mxu0 0.0
    %118 = vmatprep.subr.mxu0 0.0
    %119 = vmatpush1.msra.mxu0 0.0
    %120 = vmatprep.subr.mxu0 0.0
    %121 = vmatpush1.msra.mxu0 0.0
    %122 = vmatprep.subr.mxu0 0.0
    %123 = vmatpush1.msra.mxu0 0.0
    %124 = vmatprep.subr.mxu0 0.0
    %125 = vmatpush1.msra.mxu0 0.0
    %126 = vmatprep.subr.mxu0 0.0
    %127 = vmatpush1.msra.mxu0 0.0
    %128 = vmatprep.subr.mxu0 0.0
    %129 = vmatpush1.msra.mxu0 0.0
    %130 = vmatprep.subr.mxu0 0.0
    %131 = vmatpush1.msra.mxu0 0.0
    %132 = vmatprep.subr.mxu0 0.0
    %133 = vmatpush1.msra.mxu0 0.0
    %134 = vmatprep.subr.mxu0 0.0
    %135 = vmatpush1.msra.mxu0 0.0
    %136 = vmatprep.subr.mxu0 0.0
    %137 = vmatpush1.msra.mxu0 0.0
    %138 = vmatprep.subr.mxu0 0.0
    %139 = vmatpush1.msra.mxu0 0.0
    %140 = vmatprep.subr.mxu0 0.0
    %141 = vmatpush1.msra.mxu0 0.0
    %142 = vmatprep.subr.mxu0 0.0
    %143 = vmatpush1.msra.mxu0 0.0
    %144 = vmatprep.subr.mxu0 0.0
    %145 = vmatpush1.msra.mxu0 0.0
    %146 = vmatprep.subr.mxu0 0.0
    %147 = vmatpush1.msra.mxu0 0.0
    %148 = vmatprep.subr.mxu0 0.0
    %149 = vmatpush1.msra.mxu0 0.0
    %150 = vmatprep.subr.mxu0 0.0
    %151 = vmatpush1.msra.mxu0 0.0
    %152 = vmatprep.subr.mxu0 0.0
    %153 = vmatpush1.msra.mxu0 0.0
    %154 = vmatprep.subr.mxu0 0.0
    %155 = vmatpush1.msra.mxu0 0.0
    %156 = vmatprep.subr.mxu0 0.0
    %157 = vmatpush1.msra.mxu0 0.0
    %158 = vmatprep.subr.mxu0 0.0
    %159 = vmatpush1.msra.mxu0 0.0
    %160 = vmatprep.subr.mxu0 0.0
    %161 = vmatpush1.msra.mxu0 0.0
    %162 = vmatprep.subr.mxu0 0.0
    %163 = vmatpush1.msra.mxu0 0.0
    %164 = vmatprep.subr.mxu0 0.0
    %165 = vmatpush1.msra.mxu0 0.0
    %166 = vmatprep.mubr.f32.mxu0 0.0
    %167 = vmatmul.mubr.f32.gmra.mrb[0].mxu0 %v100
    %v168 = vpop.f32.mrb[0].mxu0
    %v169 = vadd.f32 0.0, %v168
    %v170 = vpop.f32.mrb[0].mxu0
    %v171 = vadd.f32 0.0, %v170
    %172 = vdwg.mxu0
    %173 = vmatprep.subr.mxu0 %v97
    %174 = vmatpush1.msra.mxu0 %v96
    %175 = vmatprep.subr.mxu0 0.0
    %176 = vmatpush1.msra.mxu0 0.0
    %177 = vmatprep.subr.mxu0 0.0
    %178 = vmatpush1.msra.mxu0 0.0
    %179 = vmatprep.subr.mxu0 0.0
    %180 = vmatpush1.msra.mxu0 0.0
    %181 = vmatprep.subr.mxu0 0.0
    %182 = vmatpush1.msra.mxu0 0.0
    %183 = vmatprep.subr.mxu0 0.0
    %184 = vmatpush1.msra.mxu0 0.0
    %185 = vmatprep.subr.mxu0 0.0
    %186 = vmatpush1.msra.mxu0 0.0
    %187 = vmatprep.subr.mxu0 0.0
    %188 = vmatpush1.msra.mxu0 0.0
    %189 = vmatprep.subr.mxu0 0.0
    %190 = vmatpush1.msra.mxu0 0.0
    %191 = vmatprep.subr.mxu0 0.0
    %192 = vmatpush1.msra.mxu0 0.0
    %193 = vmatprep.subr.mxu0 0.0
    %194 = vmatpush1.msra.mxu0 0.0
    %195 = vmatprep.subr.mxu0 0.0
    %196 = vmatpush1.msra.mxu0 0.0
    %197 = vmatprep.subr.mxu0 0.0
    %198 = vmatpush1.msra.mxu0 0.0
    %199 = vmatprep.subr.mxu0 0.0
    %200 = vmatpush1.msra.mxu0 0.0
    %201 = vmatprep.subr.mxu0 0.0
    %202 = vmatpush1.msra.mxu0 0.0
    %203 = vmatprep.subr.mxu0 0.0
    %204 = vmatpush1.msra.mxu0 0.0
    %205 = vmatprep.subr.mxu0 0.0
    %206 = vmatpush1.msra.mxu0 0.0
    %207 = vmatprep.subr.mxu0 0.0
    %208 = vmatpush1.msra.mxu0 0.0
    %209 = vmatprep.subr.mxu0 0.0
    %210 = vmatpush1.msra.mxu0 0.0
    %211 = vmatprep.subr.mxu0 0.0
    %212 = vmatpush1.msra.mxu0 0.0
    %213 = vmatprep.subr.mxu0 0.0
    %214 = vmatpush1.msra.mxu0 0.0
    %215 = vmatprep.subr.mxu0 0.0
    %216 = vmatpush1.msra.mxu0 0.0
    %217 = vmatprep.subr.mxu0 0.0
    %218 = vmatpush1.msra.mxu0 0.0
    %219 = vmatprep.subr.mxu0 0.0
    %220 = vmatpush1.msra.mxu0 0.0
    %221 = vmatprep.subr.mxu0 0.0
    %222 = vmatpush1.msra.mxu0 0.0
    %223 = vmatprep.subr.mxu0 0.0
    %224 = vmatpush1.msra.mxu0 0.0
    %225 = vmatprep.subr.mxu0 0.0
    %226 = vmatpush1.msra.mxu0 0.0
    %227 = vmatprep.subr.mxu0 0.0
    %228 = vmatpush1.msra.mxu0 0.0
    %229 = vmatprep.subr.mxu0 0.0
    %230 = vmatpush1.msra.mxu0 0.0
    %231 = vmatprep.subr.mxu0 0.0
    %232 = vmatpush1.msra.mxu0 0.0
    %233 = vmatprep.subr.mxu0 0.0
    %234 = vmatpush1.msra.mxu0 0.0
    %235 = vmatprep.subr.mxu0 0.0
    %236 = vmatpush1.msra.mxu0 0.0
    %237 = vmatprep.mubr.f32.mxu0 0.0
    %238 = vmatmul.mubr.f32.gmra.mrb[0].mxu0 %v100
    %v239 = vpop.f32.mrb[0].mxu0
    %v240 = vadd.f32 0.0, %v239
    %v241 = vpop.f32.mrb[0].mxu0
    %v242 = vadd.f32 0.0, %v241
    %243 = vdwg.mxu0
    %vm244 = vcmask 130048
    %v246 = vsel %vm244, %v78, 0
    %248 = vmatprep.subr.mxu0 %v85
    %249 = vmatpush1.msra.mxu0 %v84
    %250 = vmatprep.subr.mxu0 %v89
    %251 = vmatpush1.msra.mxu0 %v88
    %252 = vmatprep.subr.mxu0 0.0
    %253 = vmatpush1.msra.mxu0 0.0
    %254 = vmatprep.subr.mxu0 0.0
    %255 = vmatpush1.msra.mxu0 0.0
    %256 = vmatprep.subr.mxu0 0.0
    %257 = vmatpush1.msra.mxu0 0.0
    %258 = vmatprep.subr.mxu0 0.0
    %259 = vmatpush1.msra.mxu0 0.0
    %260 = vmatprep.subr.mxu0 0.0
    %261 = vmatpush1.msra.mxu0 0.0
    %262 = vmatprep.subr.mxu0 0.0
    %263 = vmatpush1.msra.mxu0 0.0
    %264 = vmatprep.subr.mxu0 0.0
    %265 = vmatpush1.msra.mxu0 0.0
    %266 = vmatprep.subr.mxu0 0.0
    %267 = vmatpush1.msra.mxu0 0.0
    %268 = vmatprep.subr.mxu0 0.0
    %269 = vmatpush1.msra.mxu0 0.0
    %270 = vmatprep.subr.mxu0 0.0
    %271 = vmatpush1.msra.mxu0 0.0
    %272 = vmatprep.subr.mxu0 0.0
    %273 = vmatpush1.msra.mxu0 0.0
    %274 = vmatprep.subr.mxu0 0.0
    %275 = vmatpush1.msra.mxu0 0.0
    %276 = vmatprep.subr.mxu0 0.0
    %277 = vmatpush1.msra.mxu0 0.0
    %278 = vmatprep.subr.mxu0 0.0
    %279 = vmatpush1.msra.mxu0 0.0
    %280 = vmatprep.subr.mxu0 0.0
    %281 = vmatpush1.msra.mxu0 0.0
    %282 = vmatprep.subr.mxu0 0.0
    %283 = vmatpush1.msra.mxu0 0.0
    %284 = vmatprep.subr.mxu0 0.0
    %285 = vmatpush1.msra.mxu0 0.0
    %286 = vmatprep.subr.mxu0 0.0
    %287 = vmatpush1.msra.mxu0 0.0
    %288 = vmatprep.subr.mxu0 0.0
    %289 = vmatpush1.msra.mxu0 0.0
    %290 = vmatprep.subr.mxu0 0.0
    %291 = vmatpush1.msra.mxu0 0.0
    %292 = vmatprep.subr.mxu0 0.0
    %293 = vmatpush1.msra.mxu0 0.0
    %294 = vmatprep.subr.mxu0 0.0
    %295 = vmatpush1.msra.mxu0 0.0
    %296 = vmatprep.subr.mxu0 0.0
    %297 = vmatpush1.msra.mxu0 0.0
    %298 = vmatprep.subr.mxu0 0.0
    %299 = vmatpush1.msra.mxu0 0.0
    %300 = vmatprep.subr.mxu0 0.0
    %301 = vmatpush1.msra.mxu0 0.0
    %302 = vmatprep.subr.mxu0 0.0
    %303 = vmatpush1.msra.mxu0 0.0
    %304 = vmatprep.subr.mxu0 0.0
    %305 = vmatpush1.msra.mxu0 0.0
    %306 = vmatprep.subr.mxu0 0.0
    %307 = vmatpush1.msra.mxu0 0.0
    %308 = vmatprep.subr.mxu0 0.0
    %309 = vmatpush1.msra.mxu0 0.0
    %310 = vmatprep.subr.mxu0 0.0
    %311 = vmatpush1.msra.mxu0 0.0
    %312 = vmatprep.mubr.f32.mxu0 0.0
    %313 = vmatmul.mubr.f32.gmra.mrb[0].mxu0 %v246
    %v314 = vpop.f32.mrb[0].mxu0
    %v315 = vadd.f32 %v169, %v314
    %v316 = vpop.f32.mrb[0].mxu0
    %v317 = vadd.f32 %v171, %v316
    %318 = vdwg.mxu0
    %319 = vmatprep.subr.mxu0 %v87
    %320 = vmatpush1.msra.mxu0 %v86
    %321 = vmatprep.subr.mxu0 %v91
    %322 = vmatpush1.msra.mxu0 %v90
    %323 = vmatprep.subr.mxu0 0.0
    %324 = vmatpush1.msra.mxu0 0.0
    %325 = vmatprep.subr.mxu0 0.0
    %326 = vmatpush1.msra.mxu0 0.0
    %327 = vmatprep.subr.mxu0 0.0
    %328 = vmatpush1.msra.mxu0 0.0
    %329 = vmatprep.subr.mxu0 0.0
    %330 = vmatpush1.msra.mxu0 0.0
    %331 = vmatprep.subr.mxu0 0.0
    %332 = vmatpush1.msra.mxu0 0.0
    %333 = vmatprep.subr.mxu0 0.0
    %334 = vmatpush1.msra.mxu0 0.0
    %335 = vmatprep.subr.mxu0 0.0
    %336 = vmatpush1.msra.mxu0 0.0
    %337 = vmatprep.subr.mxu0 0.0
    %338 = vmatpush1.msra.mxu0 0.0
    %339 = vmatprep.subr.mxu0 0.0
    %340 = vmatpush1.msra.mxu0 0.0
    %341 = vmatprep.subr.mxu0 0.0
    %342 = vmatpush1.msra.mxu0 0.0
    %343 = vmatprep.subr.mxu0 0.0
    %344 = vmatpush1.msra.mxu0 0.0
    %345 = vmatprep.subr.mxu0 0.0
    %346 = vmatpush1.msra.mxu0 0.0
    %347 = vmatprep.subr.mxu0 0.0
    %348 = vmatpush1.msra.mxu0 0.0
    %349 = vmatprep.subr.mxu0 0.0
    %350 = vmatpush1.msra.mxu0 0.0
    %351 = vmatprep.subr.mxu0 0.0
    %352 = vmatpush1.msra.mxu0 0.0
    %353 = vmatprep.subr.mxu0 0.0
    %354 = vmatpush1.msra.mxu0 0.0
    %355 = vmatprep.subr.mxu0 0.0
    %356 = vmatpush1.msra.mxu0 0.0
    %357 = vmatprep.subr.mxu0 0.0
    %358 = vmatpush1.msra.mxu0 0.0
    %359 = vmatprep.subr.mxu0 0.0
    %360 = vmatpush1.msra.mxu0 0.0
    %361 = vmatprep.subr.mxu0 0.0
    %362 = vmatpush1.msra.mxu0 0.0
    %363 = vmatprep.subr.mxu0 0.0
    %364 = vmatpush1.msra.mxu0 0.0
    %365 = vmatprep.subr.mxu0 0.0
    %366 = vmatpush1.msra.mxu0 0.0
    %367 = vmatprep.subr.mxu0 0.0
    %368 = vmatpush1.msra.mxu0 0.0
    %369 = vmatprep.subr.mxu0 0.0
    %370 = vmatpush1.msra.mxu0 0.0
    %371 = vmatprep.subr.mxu0 0.0
    %372 = vmatpush1.msra.mxu0 0.0
    %373 = vmatprep.subr.mxu0 0.0
    %374 = vmatpush1.msra.mxu0 0.0
    %375 = vmatprep.subr.mxu0 0.0
    %376 = vmatpush1.msra.mxu0 0.0
    %377 = vmatprep.subr.mxu0 0.0
    %378 = vmatpush1.msra.mxu0 0.0
    %379 = vmatprep.subr.mxu0 0.0
    %380 = vmatpush1.msra.mxu0 0.0
    %381 = vmatprep.subr.mxu0 0.0
    %382 = vmatpush1.msra.mxu0 0.0
    %383 = vmatprep.mubr.f32.mxu0 0.0
    %384 = vmatmul.mubr.f32.gmra.mrb[0].mxu0 %v246
    %v385 = vpop.f32.mrb[0].mxu0
    %v386 = vadd.f32 %v240, %v385
    %v387 = vpop.f32.mrb[0].mxu0
    %v388 = vadd.f32 %v242, %v387
    %389 = vdwg.mxu0
    %v390 = vld [vmem:[%s4] sm:$0xf]
    %v392 = vlaneseq
    %v393 = vshrl.u32 %v392, 7
    %v394 = vsub.s32 0, %v393
    %v395 = vrot.slane %v390, %v394
    %v396 = vlaneseq
    %v397 = vshrl.u32 %v396, 7
    %v398 = vsub.s32 1, %v397
    %v399 = vrot.slane %v390, %v398
    %v400 = vlaneseq
    %v401 = vshrl.u32 %v400, 7
    %v402 = vsub.s32 2, %v401
    %v403 = vrot.slane %v390, %v402
    %v404 = vlaneseq
    %v405 = vshrl.u32 %v404, 7
    %v406 = vsub.s32 3, %v405
    %v407 = vrot.slane %v390, %v406
    %v412 = vadd.f32 %v315, %v395
    %v413 = vadd.f32 %v317, %v399
    %v414 = vadd.f32 %v386, %v403
    %v415 = vadd.f32 %v388, %v407
    %v416 = vmax.f32 %v412, 0.0
    %v417 = vmax.f32 %v413, 0.0
    %v418 = vmax.f32 %v414, 0.0
    %v419 = vmax.f32 %v415, 0.0
    %v420 = vld [vmem:[#allocation2] sm:$0xff]
    %v421 = vld [vmem:[#allocation2 + $0x8] sm:$0xf]
    %v422 = vld [vmem:[#allocation2 + $0xc] sm:$0xff]
    %v423 = vld [vmem:[#allocation2 + $0x14] sm:$0xf]
    %v424 = vld [vmem:[#allocation2 + $0x18] sm:$0xff]
    %v425 = vld [vmem:[#allocation2 + $0x20] sm:$0xf]
    %v426 = vld [vmem:[#allocation2 + $0x24] sm:$0xff]
    %v427 = vld [vmem:[#allocation2 + $0x2c] sm:$0xf]
    %v428 = vld [vmem:[#allocation2 + $0x30] sm:$0xff]
    %v429 = vld [vmem:[#allocation2 + $0x38] sm:$0xf]
    %v430 = vld [vmem:[#allocation2 + $0x3c] sm:$0xff]
    %v431 = vld [vmem:[#allocation2 + $0x44] sm:$0xf]
    %v432 = vld [vmem:[#allocation2 + $0x48] sm:$0xff]
    %v433 = vld [vmem:[#allocation2 + $0x50] sm:$0xf]
    %v434 = vld [vmem:[#allocation2 + $0x54] sm:$0xff]
    %v435 = vld [vmem:[#allocation2 + $0x5c] sm:$0xf]
    %v436 = vld [vmem:[#allocation2 + $0x60] sm:$0xff]
    %v437 = vld [vmem:[#allocation2 + $0x68] sm:$0xf]
    %v438 = vld [vmem:[#allocation2 + $0x6c] sm:$0xff]
    %v439 = vld [vmem:[#allocation2 + $0x74] sm:$0xf]
    %v440 = vld [vmem:[#allocation2 + $0x78] sm:$0xff]
    %v441 = vld [vmem:[#allocation2 + $0x80] sm:$0xf]
    %v442 = vld [vmem:[#allocation2 + $0x84] sm:$0xff]
    %v443 = vld [vmem:[#allocation2 + $0x8c] sm:$0xf]
    %v444 = vld [vmem:[#allocation2 + $0x90] sm:$0xff]
    %v445 = vld [vmem:[#allocation2 + $0x98] sm:$0xf]
    %v446 = vld [vmem:[#allocation2 + $0x9c] sm:$0xff]
    %v447 = vld [vmem:[#allocation2 + $0xa4] sm:$0xf]
    %v448 = vld [vmem:[#allocation2 + $0xa8] sm:$0xff]
    %v449 = vld [vmem:[#allocation2 + $0xb0] sm:$0xf]
    %v450 = vld [vmem:[#allocation2 + $0xb4] sm:$0xff]
    %v451 = vld [vmem:[#allocation2 + $0xbc] sm:$0xf]
    %v452 = vld [vmem:[#allocation2 + $0xc0] sm:$0xff]
    %v453 = vld [vmem:[#allocation2 + $0xc8] sm:$0xf]
    %v454 = vld [vmem:[#allocation2 + $0xcc] sm:$0xff]
    %v455 = vld [vmem:[#allocation2 + $0xd4] sm:$0xf]
    %v456 = vld [vmem:[#allocation2 + $0xd8] sm:$0xff]
    %v457 = vld [vmem:[#allocation2 + $0xe0] sm:$0xf]
    %v458 = vld [vmem:[#allocation2 + $0xe4] sm:$0xff]
    %v459 = vld [vmem:[#allocation2 + $0xec] sm:$0xf]
    %v460 = vld [vmem:[#allocation2 + $0xf0] sm:$0xff]
    %v461 = vld [vmem:[#allocation2 + $0xf8] sm:$0xf]
    %v462 = vld [vmem:[#allocation2 + $0xfc] sm:$0xff]
    %v463 = vld [vmem:[#allocation2 + $0x104] sm:$0xf]
    %v464 = vld [vmem:[#allocation2 + $0x108] sm:$0xff]
    %v465 = vld [vmem:[#allocation2 + $0x110] sm:$0xf]
    %v466 = vld [vmem:[#allocation2 + $0x114] sm:$0xff]
    %v467 = vld [vmem:[#allocation2 + $0x11c] sm:$0xf]
    %v468 = vld [vmem:[#allocation2 + $0x120] sm:$0xff]
    %v469 = vld [vmem:[#allocation2 + $0x128] sm:$0xf]
    %v470 = vld [vmem:[#allocation2 + $0x12c] sm:$0xff]
    %v471 = vld [vmem:[#allocation2 + $0x134] sm:$0xf]
    %v472 = vld [vmem:[#allocation2 + $0x138] sm:$0xff]
    %v473 = vld [vmem:[#allocation2 + $0x140] sm:$0xf]
    %v474 = vld [vmem:[#allocation2 + $0x144] sm:$0xff]
    %v475 = vld [vmem:[#allocation2 + $0x14c] sm:$0xf]
    %v476 = vld [vmem:[#allocation2 + $0x150] sm:$0xff]
    %v477 = vld [vmem:[#allocation2 + $0x158] sm:$0xf]
    %v478 = vld [vmem:[#allocation2 + $0x15c] sm:$0xff]
    %v479 = vld [vmem:[#allocation2 + $0x164] sm:$0xf]
    %v480 = vld [vmem:[#allocation2 + $0x168] sm:$0xff]
    %v481 = vld [vmem:[#allocation2 + $0x170] sm:$0xf]
    %v482 = vld [vmem:[#allocation2 + $0x174] sm:$0xff]
    %v483 = vld [vmem:[#allocation2 + $0x17c] sm:$0xf]
    %v484 = vld [vmem:[#allocation2 + $0x180] sm:$0xff]
    %v485 = vld [vmem:[#allocation2 + $0x188] sm:$0xf]
    %v486 = vld [vmem:[#allocation2 + $0x18c] sm:$0xff]
    %v487 = vld [vmem:[#allocation2 + $0x194] sm:$0xf]
    %v488 = vld [vmem:[#allocation2 + $0x198] sm:$0xff]
    %v489 = vld [vmem:[#allocation2 + $0x1a0] sm:$0xf]
    %v490 = vld [vmem:[#allocation2 + $0x1a4] sm:$0xff]
    %v491 = vld [vmem:[#allocation2 + $0x1ac] sm:$0xf]
    %v492 = vld [vmem:[#allocation2 + $0x1b0] sm:$0xff]
    %v493 = vld [vmem:[#allocation2 + $0x1b8] sm:$0xf]
    %v494 = vld [vmem:[#allocation2 + $0x1bc] sm:$0xff]
    %v495 = vld [vmem:[#allocation2 + $0x1c4] sm:$0xf]
    %v496 = vld [vmem:[#allocation2 + $0x1c8] sm:$0xff]
    %v497 = vld [vmem:[#allocation2 + $0x1d0] sm:$0xf]
    %v498 = vld [vmem:[#allocation2 + $0x1d4] sm:$0xff]
    %v499 = vld [vmem:[#allocation2 + $0x1dc] sm:$0xf]
    %v500 = vld [vmem:[#allocation2 + $0x1e0] sm:$0xff]
    %v501 = vld [vmem:[#allocation2 + $0x1e8] sm:$0xf]
    %v502 = vld [vmem:[#allocation2 + $0x1ec] sm:$0xff]
    %v503 = vld [vmem:[#allocation2 + $0x1f4] sm:$0xf]
    %v504 = vld [vmem:[#allocation2 + $0x1f8] sm:$0xff]
    %v505 = vld [vmem:[#allocation2 + $0x200] sm:$0xf]
    %v506 = vld [vmem:[#allocation2 + $0x204] sm:$0xff]
    %v507 = vld [vmem:[#allocation2 + $0x20c] sm:$0xf]
    %v508 = vld [vmem:[#allocation2 + $0x210] sm:$0xff]
    %v509 = vld [vmem:[#allocation2 + $0x218] sm:$0xf]
    %v510 = vld [vmem:[#allocation2 + $0x21c] sm:$0xff]
    %v511 = vld [vmem:[#allocation2 + $0x224] sm:$0xf]
    %v512 = vld [vmem:[#allocation2 + $0x228] sm:$0xff]
    %v513 = vld [vmem:[#allocation2 + $0x230] sm:$0xf]
    %v514 = vld [vmem:[#allocation2 + $0x234] sm:$0xff]
    %v515 = vld [vmem:[#allocation2 + $0x23c] sm:$0xf]
    %v516 = vld [vmem:[#allocation2 + $0x240] sm:$0xff]
    %v517 = vld [vmem:[#allocation2 + $0x248] sm:$0xf]
    %v518 = vld [vmem:[#allocation2 + $0x24c] sm:$0xff]
    %v519 = vld [vmem:[#allocation2 + $0x254] sm:$0xf]
    %v520 = vunpack.c.l.bf16 %v420
    %v521 = vunpack.c.h.bf16 %v420
    %v522 = vunpack.c.l.bf16 %v421
    %v523 = vunpack.c.l.bf16 %v422
    %v524 = vunpack.c.h.bf16 %v422
    %v525 = vunpack.c.l.bf16 %v423
    %v526 = vunpack.c.l.bf16 %v424
    %v527 = vunpack.c.h.bf16 %v424
    %v528 = vunpack.c.l.bf16 %v425
    %v529 = vunpack.c.l.bf16 %v426
    %v530 = vunpack.c.h.bf16 %v426
    %v531 = vunpack.c.l.bf16 %v427
    %v532 = vunpack.c.l.bf16 %v428
    %v533 = vunpack.c.h.bf16 %v428
    %v534 = vunpack.c.l.bf16 %v429
    %v535 = vunpack.c.l.bf16 %v430
    %v536 = vunpack.c.h.bf16 %v430
    %v537 = vunpack.c.l.bf16 %v431
    %v538 = vunpack.c.l.bf16 %v432
    %v539 = vunpack.c.h.bf16 %v432
    %v540 = vunpack.c.l.bf16 %v433
    %v541 = vunpack.c.l.bf16 %v434
    %v542 = vunpack.c.h.bf16 %v434
    %v543 = vunpack.c.l.bf16 %v435
    %v544 = vunpack.c.l.bf16 %v436
    %v545 = vunpack.c.h.bf16 %v436
    %v546 = vunpack.c.l.bf16 %v437
    %v547 = vunpack.c.l.bf16 %v438
    %v548 = vunpack.c.h.bf16 %v438
    %v549 = vunpack.c.l.bf16 %v439
    %v550 = vunpack.c.l.bf16 %v440
    %v551 = vunpack.c.h.bf16 %v440
    %v552 = vunpack.c.l.bf16 %v441
    %v553 = vunpack.c.l.bf16 %v442
    %v554 = vunpack.c.h.bf16 %v442
    %v555 = vunpack.c.l.bf16 %v443
    %v556 = vunpack.c.l.bf16 %v444
    %v557 = vunpack.c.h.bf16 %v444
    %v558 = vunpack.c.l.bf16 %v445
    %v559 = vunpack.c.l.bf16 %v446
    %v560 = vunpack.c.h.bf16 %v446
    %v561 = vunpack.c.l.bf16 %v447
    %v562 = vunpack.c.l.bf16 %v448
    %v563 = vunpack.c.h.bf16 %v448
    %v564 = vunpack.c.l.bf16 %v449
    %v565 = vunpack.c.l.bf16 %v450
    %v566 = vunpack.c.h.bf16 %v450
    %v567 = vunpack.c.l.bf16 %v451
    %v568 = vunpack.c.l.bf16 %v452
    %v569 = vunpack.c.h.bf16 %v452
    %v570 = vunpack.c.l.bf16 %v453
    %v571 = vunpack.c.l.bf16 %v454
    %v572 = vunpack.c.h.bf16 %v454
    %v573 = vunpack.c.l.bf16 %v455
    %v574 = vunpack.c.l.bf16 %v456
    %v575 = vunpack.c.h.bf16 %v456
    %v576 = vunpack.c.l.bf16 %v457
    %v577 = vunpack.c.l.bf16 %v458
    %v578 = vunpack.c.h.bf16 %v458
    %v579 = vunpack.c.l.bf16 %v459
    %v580 = vunpack.c.l.bf16 %v460
    %v581 = vunpack.c.h.bf16 %v460
    %v582 = vunpack.c.l.bf16 %v461
    %v583 = vunpack.c.l.bf16 %v462
    %v584 = vunpack.c.h.bf16 %v462
    %v585 = vunpack.c.l.bf16 %v463
    %v586 = vunpack.c.l.bf16 %v464
    %v587 = vunpack.c.h.bf16 %v464
    %v588 = vunpack.c.l.bf16 %v465
    %v589 = vunpack.c.l.bf16 %v466
    %v590 = vunpack.c.h.bf16 %v466
    %v591 = vunpack.c.l.bf16 %v467
    %v592 = vunpack.c.l.bf16 %v468
    %v593 = vunpack.c.h.bf16 %v468
    %v594 = vunpack.c.l.bf16 %v469
    %v595 = vunpack.c.l.bf16 %v470
    %v596 = vunpack.c.h.bf16 %v470
    %v597 = vunpack.c.l.bf16 %v471
    %v598 = vunpack.c.l.bf16 %v472
    %v599 = vunpack.c.h.bf16 %v472
    %v600 = vunpack.c.l.bf16 %v473
    %v601 = vunpack.c.l.bf16 %v474
    %v602 = vunpack.c.h.bf16 %v474
    %v603 = vunpack.c.l.bf16 %v475
    %v604 = vunpack.c.l.bf16 %v476
    %v605 = vunpack.c.h.bf16 %v476
    %v606 = vunpack.c.l.bf16 %v477
    %v607 = vunpack.c.l.bf16 %v478
    %v608 = vunpack.c.h.bf16 %v478
    %v609 = vunpack.c.l.bf16 %v479
    %v610 = vunpack.c.l.bf16 %v480
    %v611 = vunpack.c.h.bf16 %v480
    %v612 = vunpack.c.l.bf16 %v481
    %v613 = vunpack.c.l.bf16 %v482
    %v614 = vunpack.c.h.bf16 %v482
    %v615 = vunpack.c.l.bf16 %v483
    %v616 = vunpack.c.l.bf16 %v484
    %v617 = vunpack.c.h.bf16 %v484
    %v618 = vunpack.c.l.bf16 %v485
    %v619 = vunpack.c.l.bf16 %v486
    %v620 = vunpack.c.h.bf16 %v486
    %v621 = vunpack.c.l.bf16 %v487
    %v622 = vunpack.c.l.bf16 %v488
    %v623 = vunpack.c.h.bf16 %v488
    %v624 = vunpack.c.l.bf16 %v489
    %v625 = vunpack.c.l.bf16 %v490
    %v626 = vunpack.c.h.bf16 %v490
    %v627 = vunpack.c.l.bf16 %v491
    %v628 = vunpack.c.l.bf16 %v492
    %v629 = vunpack.c.h.bf16 %v492
    %v630 = vunpack.c.l.bf16 %v493
    %v631 = vunpack.c.l.bf16 %v494
    %v632 = vunpack.c.h.bf16 %v494
    %v633 = vunpack.c.l.bf16 %v495
    %v634 = vunpack.c.l.bf16 %v496
    %v635 = vunpack.c.h.bf16 %v496
    %v636 = vunpack.c.l.bf16 %v497
    %v637 = vunpack.c.l.bf16 %v498
    %v638 = vunpack.c.h.bf16 %v498
    %v639 = vunpack.c.l.bf16 %v499
    %v640 = vunpack.c.l.bf16 %v500
    %v641 = vunpack.c.h.bf16 %v500
    %v642 = vunpack.c.l.bf16 %v501
    %v643 = vunpack.c.l.bf16 %v502
    %v644 = vunpack.c.h.bf16 %v502
    %v645 = vunpack.c.l.bf16 %v503
    %v646 = vunpack.c.l.bf16 %v504
    %v647 = vunpack.c.h.bf16 %v504
    %v648 = vunpack.c.l.bf16 %v505
    %v649 = vunpack.c.l.bf16 %v506
    %v650 = vunpack.c.h.bf16 %v506
    %v651 = vunpack.c.l.bf16 %v507
    %v652 = vunpack.c.l.bf16 %v508
    %v653 = vunpack.c.h.bf16 %v508
    %v654 = vunpack.c.l.bf16 %v509
    %v655 = vunpack.c.l.bf16 %v510
    %v656 = vunpack.c.h.bf16 %v510
    %v657 = vunpack.c.l.bf16 %v511
    %v658 = vunpack.c.l.bf16 %v512
    %v659 = vunpack.c.h.bf16 %v512
    %v660 = vunpack.c.l.bf16 %v513
    %v661 = vunpack.c.l.bf16 %v514
    %v662 = vunpack.c.h.bf16 %v514
    %v663 = vunpack.c.l.bf16 %v515
    %v664 = vunpack.c.l.bf16 %v516
    %v665 = vunpack.c.h.bf16 %v516
    %v666 = vunpack.c.l.bf16 %v517
    %v667 = vunpack.c.l.bf16 %v518
    %v668 = vunpack.c.h.bf16 %v518
    %v669 = vunpack.c.l.bf16 %v519
    %v670 = vld [vmem:[%s6] sm:$0x7]
    %v672 = vlaneseq
    %v673 = vshrl.u32 %v672, 7
    %v674 = vsub.s32 0, %v673
    %v675 = vrot.slane %v670, %v674
    %v676 = vlaneseq
    %v677 = vshrl.u32 %v676, 7
    %v678 = vsub.s32 1, %v677
    %v679 = vrot.slane %v670, %v678
    %v680 = vlaneseq
    %v681 = vshrl.u32 %v680, 7
    %v682 = vsub.s32 2, %v681
    %v683 = vrot.slane %v670, %v682
    %v688 = vsel %vm244, %v419, 0
    %690 = vmatprep.subr.mxu0 %v521
    %691 = vmatpush1.msra.mxu0 %v520
    %692 = vmatprep.subr.mxu0 %v524
    %693 = vmatpush1.msra.mxu0 %v523
    %694 = vmatprep.subr.mxu0 %v527
    %695 = vmatpush1.msra.mxu0 %v526
    %696 = vmatprep.subr.mxu0 %v530
    %697 = vmatpush1.msra.mxu0 %v529
    %698 = vmatprep.subr.mxu0 %v533
    %699 = vmatpush1.msra.mxu0 %v532
    %700 = vmatprep.subr.mxu0 %v536
    %701 = vmatpush1.msra.mxu0 %v535
    %702 = vmatprep.subr.mxu0 %v539
    %703 = vmatpush1.msra.mxu0 %v538
    %704 = vmatprep.subr.mxu0 %v542
    %705 = vmatpush1.msra.mxu0 %v541
    %706 = vmatprep.subr.mxu0 %v545
    %707 = vmatpush1.msra.mxu0 %v544
    %708 = vmatprep.subr.mxu0 %v548
    %709 = vmatpush1.msra.mxu0 %v547
    %710 = vmatprep.subr.mxu0 %v551
    %711 = vmatpush1.msra.mxu0 %v550
    %712 = vmatprep.subr.mxu0 %v554
    %713 = vmatpush1.msra.mxu0 %v553
    %714 = vmatprep.subr.mxu0 %v557
    %715 = vmatpush1.msra.mxu0 %v556
    %716 = vmatprep.subr.mxu0 %v560
    %717 = vmatpush1.msra.mxu0 %v559
    %718 = vmatprep.subr.mxu0 %v563
    %719 = vmatpush1.msra.mxu0 %v562
    %720 = vmatprep.subr.mxu0 %v566
    %721 = vmatpush1.msra.mxu0 %v565
    %722 = vmatprep.subr.mxu0 %v569
    %723 = vmatpush1.msra.mxu0 %v568
    %724 = vmatprep.subr.mxu0 %v572
    %725 = vmatpush1.msra.mxu0 %v571
    %726 = vmatprep.subr.mxu0 %v575
    %727 = vmatpush1.msra.mxu0 %v574
    %728 = vmatprep.subr.mxu0 %v578
    %729 = vmatpush1.msra.mxu0 %v577
    %730 = vmatprep.subr.mxu0 %v581
    %731 = vmatpush1.msra.mxu0 %v580
    %732 = vmatprep.subr.mxu0 %v584
    %733 = vmatpush1.msra.mxu0 %v583
    %734 = vmatprep.subr.mxu0 %v587
    %735 = vmatpush1.msra.mxu0 %v586
    %736 = vmatprep.subr.mxu0 %v590
    %737 = vmatpush1.msra.mxu0 %v589
    %738 = vmatprep.subr.mxu0 %v593
    %739 = vmatpush1.msra.mxu0 %v592
    %740 = vmatprep.subr.mxu0 %v596
    %741 = vmatpush1.msra.mxu0 %v595
    %742 = vmatprep.subr.mxu0 %v599
    %743 = vmatpush1.msra.mxu0 %v598
    %744 = vmatprep.subr.mxu0 %v602
    %745 = vmatpush1.msra.mxu0 %v601
    %746 = vmatprep.subr.mxu0 %v605
    %747 = vmatpush1.msra.mxu0 %v604
    %748 = vmatprep.subr.mxu0 %v608
    %749 = vmatpush1.msra.mxu0 %v607
    %750 = vmatprep.subr.mxu0 %v611
    %751 = vmatpush1.msra.mxu0 %v610
    %752 = vmatprep.subr.mxu0 %v614
    %753 = vmatpush1.msra.mxu0 %v613
    %754 = vmatprep.mubr.f32.mxu0 %v417
    %755 = vmatmul.mubr.f32.gmra.mrb[0].mxu0 %v416
    %v756 = vpop.f32.mrb[0].mxu0
    %v757 = vadd.f32 %v675, %v756
    %v758 = vpop.f32.mrb[0].mxu0
    %v759 = vadd.f32 %v679, %v758
    %760 = vdwg.mxu0
    %761 = vmatprep.subr.mxu0 %v617
    %762 = vmatpush1.msra.mxu0 %v616
    %763 = vmatprep.subr.mxu0 %v620
    %764 = vmatpush1.msra.mxu0 %v619
    %765 = vmatprep.subr.mxu0 %v623
    %766 = vmatpush1.msra.mxu0 %v622
    %767 = vmatprep.subr.mxu0 %v626
    %768 = vmatpush1.msra.mxu0 %v625
    %769 = vmatprep.subr.mxu0 %v629
    %770 = vmatpush1.msra.mxu0 %v628
    %771 = vmatprep.subr.mxu0 %v632
    %772 = vmatpush1.msra.mxu0 %v631
    %773 = vmatprep.subr.mxu0 %v635
    %774 = vmatpush1.msra.mxu0 %v634
    %775 = vmatprep.subr.mxu0 %v638
    %776 = vmatpush1.msra.mxu0 %v637
    %777 = vmatprep.subr.mxu0 %v641
    %778 = vmatpush1.msra.mxu0 %v640
    %779 = vmatprep.subr.mxu0 %v644
    %780 = vmatpush1.msra.mxu0 %v643
    %781 = vmatprep.subr.mxu0 %v647
    %782 = vmatpush1.msra.mxu0 %v646
    %783 = vmatprep.subr.mxu0 %v650
    %784 = vmatpush1.msra.mxu0 %v649
    %785 = vmatprep.subr.mxu0 %v653
    %786 = vmatpush1.msra.mxu0 %v652
    %787 = vmatprep.subr.mxu0 %v656
    %788 = vmatpush1.msra.mxu0 %v655
    %789 = vmatprep.subr.mxu0 %v659
    %790 = vmatpush1.msra.mxu0 %v658
    %791 = vmatprep.subr.mxu0 %v662
    %792 = vmatpush1.msra.mxu0 %v661
    %793 = vmatprep.subr.mxu0 %v665
    %794 = vmatpush1.msra.mxu0 %v664
    %795 = vmatprep.subr.mxu0 %v668
    %796 = vmatpush1.msra.mxu0 %v667
    %797 = vmatprep.subr.mxu0 0.0
    %798 = vmatpush1.msra.mxu0 0.0
    %799 = vmatprep.subr.mxu0 0.0
    %800 = vmatpush1.msra.mxu0 0.0
    %801 = vmatprep.subr.mxu0 0.0
    %802 = vmatpush1.msra.mxu0 0.0
    %803 = vmatprep.subr.mxu0 0.0
    %804 = vmatpush1.msra.mxu0 0.0
    %805 = vmatprep.subr.mxu0 0.0
    %806 = vmatpush1.msra.mxu0 0.0
    %807 = vmatprep.subr.mxu0 0.0
    %808 = vmatpush1.msra.mxu0 0.0
    %809 = vmatprep.subr.mxu0 0.0
    %810 = vmatpush1.msra.mxu0 0.0
    %811 = vmatprep.subr.mxu0 0.0
    %812 = vmatpush1.msra.mxu0 0.0
    %813 = vmatprep.subr.mxu0 0.0
    %814 = vmatpush1.msra.mxu0 0.0
    %815 = vmatprep.subr.mxu0 0.0
    %816 = vmatpush1.msra.mxu0 0.0
    %817 = vmatprep.subr.mxu0 0.0
    %818 = vmatpush1.msra.mxu0 0.0
    %819 = vmatprep.subr.mxu0 0.0
    %820 = vmatpush1.msra.mxu0 0.0
    %821 = vmatprep.subr.mxu0 0.0
    %822 = vmatpush1.msra.mxu0 0.0
    %823 = vmatprep.subr.mxu0 0.0
    %824 = vmatpush1.msra.mxu0 0.0
    %825 = vmatprep.mubr.f32.mxu0 %v688
    %826 = vmatmul.mubr.f32.gmra.mrb[0].mxu0 %v418
    %v827 = vpop.f32.mrb[0].mxu0
    %v828 = vadd.f32 %v757, %v827
    %v829 = vpop.f32.mrb[0].mxu0
    %v830 = vadd.f32 %v759, %v829
    %831 = vdwg.mxu0
    %832 = vmatprep.subr.mxu0 0.0
    %833 = vmatpush1.msra.mxu0 %v522
    %834 = vmatprep.subr.mxu0 0.0
    %835 = vmatpush1.msra.mxu0 %v525
    %836 = vmatprep.subr.mxu0 0.0
    %837 = vmatpush1.msra.mxu0 %v528
    %838 = vmatprep.subr.mxu0 0.0
    %839 = vmatpush1.msra.mxu0 %v531
    %840 = vmatprep.subr.mxu0 0.0
    %841 = vmatpush1.msra.mxu0 %v534
    %842 = vmatprep.subr.mxu0 0.0
    %843 = vmatpush1.msra.mxu0 %v537
    %844 = vmatprep.subr.mxu0 0.0
    %845 = vmatpush1.msra.mxu0 %v540
    %846 = vmatprep.subr.mxu0 0.0
    %847 = vmatpush1.msra.mxu0 %v543
    %848 = vmatprep.subr.mxu0 0.0
    %849 = vmatpush1.msra.mxu0 %v546
    %850 = vmatprep.subr.mxu0 0.0
    %851 = vmatpush1.msra.mxu0 %v549
    %852 = vmatprep.subr.mxu0 0.0
    %853 = vmatpush1.msra.mxu0 %v552
    %854 = vmatprep.subr.mxu0 0.0
    %855 = vmatpush1.msra.mxu0 %v555
    %856 = vmatprep.subr.mxu0 0.0
    %857 = vmatpush1.msra.mxu0 %v558
    %858 = vmatprep.subr.mxu0 0.0
    %859 = vmatpush1.msra.mxu0 %v561
    %860 = vmatprep.subr.mxu0 0.0
    %861 = vmatpush1.msra.mxu0 %v564
    %862 = vmatprep.subr.mxu0 0.0
    %863 = vmatpush1.msra.mxu0 %v567
    %864 = vmatprep.subr.mxu0 0.0
    %865 = vmatpush1.msra.mxu0 %v570
    %866 = vmatprep.subr.mxu0 0.0
    %867 = vmatpush1.msra.mxu0 %v573
    %868 = vmatprep.subr.mxu0 0.0
    %869 = vmatpush1.msra.mxu0 %v576
    %870 = vmatprep.subr.mxu0 0.0
    %871 = vmatpush1.msra.mxu0 %v579
    %872 = vmatprep.subr.mxu0 0.0
    %873 = vmatpush1.msra.mxu0 %v582
    %874 = vmatprep.subr.mxu0 0.0
    %875 = vmatpush1.msra.mxu0 %v585
    %876 = vmatprep.subr.mxu0 0.0
    %877 = vmatpush1.msra.mxu0 %v588
    %878 = vmatprep.subr.mxu0 0.0
    %879 = vmatpush1.msra.mxu0 %v591
    %880 = vmatprep.subr.mxu0 0.0
    %881 = vmatpush1.msra.mxu0 %v594
    %882 = vmatprep.subr.mxu0 0.0
    %883 = vmatpush1.msra.mxu0 %v597
    %884 = vmatprep.subr.mxu0 0.0
    %885 = vmatpush1.msra.mxu0 %v600
    %886 = vmatprep.subr.mxu0 0.0
    %887 = vmatpush1.msra.mxu0 %v603
    %888 = vmatprep.subr.mxu0 0.0
    %889 = vmatpush1.msra.mxu0 %v606
    %890 = vmatprep.subr.mxu0 0.0
    %891 = vmatpush1.msra.mxu0 %v609
    %892 = vmatprep.subr.mxu0 0.0
    %893 = vmatpush1.msra.mxu0 %v612
    %894 = vmatprep.subr.mxu0 0.0
    %895 = vmatpush1.msra.mxu0 %v615
    %896 = vmatprep.mubr.f32.mxu0 %v417
    %897 = vmatmul.mubr.f32.gmra.mrb[0].mxu0 %v416
    %v898 = vpop.f32.mrb[0].mxu0
    %v899 = vadd.f32 %v683, %v898
    %v900 = vpop.f32.mrb[0].mxu0
    %901 = vdwg.mxu0
    %902 = vmatprep.subr.mxu0 0.0
    %903 = vmatpush1.msra.mxu0 %v618
    %904 = vmatprep.subr.mxu0 0.0
    %905 = vmatpush1.msra.mxu0 %v621
    %906 = vmatprep.subr.mxu0 0.0
    %907 = vmatpush1.msra.mxu0 %v624
    %908 = vmatprep.subr.mxu0 0.0
    %909 = vmatpush1.msra.mxu0 %v627
    %910 = vmatprep.subr.mxu0 0.0
    %911 = vmatpush1.msra.mxu0 %v630
    %912 = vmatprep.subr.mxu0 0.0
    %913 = vmatpush1.msra.mxu0 %v633
    %914 = vmatprep.subr.mxu0 0.0
    %915 = vmatpush1.msra.mxu0 %v636
    %916 = vmatprep.subr.mxu0 0.0
    %917 = vmatpush1.msra.mxu0 %v639
    %918 = vmatprep.subr.mxu0 0.0
    %919 = vmatpush1.msra.mxu0 %v642
    %920 = vmatprep.subr.mxu0 0.0
    %921 = vmatpush1.msra.mxu0 %v645
    %922 = vmatprep.subr.mxu0 0.0
    %923 = vmatpush1.msra.mxu0 %v648
    %924 = vmatprep.subr.mxu0 0.0
    %925 = vmatpush1.msra.mxu0 %v651
    %926 = vmatprep.subr.mxu0 0.0
    %927 = vmatpush1.msra.mxu0 %v654
    %928 = vmatprep.subr.mxu0 0.0
    %929 = vmatpush1.msra.mxu0 %v657
    %930 = vmatprep.subr.mxu0 0.0
    %931 = vmatpush1.msra.mxu0 %v660
    %932 = vmatprep.subr.mxu0 0.0
    %933 = vmatpush1.msra.mxu0 %v663
    %934 = vmatprep.subr.mxu0 0.0
    %935 = vmatpush1.msra.mxu0 %v666
    %936 = vmatprep.subr.mxu0 0.0
    %937 = vmatpush1.msra.mxu0 %v669
    %938 = vmatprep.subr.mxu0 0.0
    %939 = vmatpush1.msra.mxu0 0.0
    %940 = vmatprep.subr.mxu0 0.0
    %941 = vmatpush1.msra.mxu0 0.0
    %942 = vmatprep.subr.mxu0 0.0
    %943 = vmatpush1.msra.mxu0 0.0
    %944 = vmatprep.subr.mxu0 0.0
    %945 = vmatpush1.msra.mxu0 0.0
    %946 = vmatprep.subr.mxu0 0.0
    %947 = vmatpush1.msra.mxu0 0.0
    %948 = vmatprep.subr.mxu0 0.0
    %949 = vmatpush1.msra.mxu0 0.0
    %950 = vmatprep.subr.mxu0 0.0
    %951 = vmatpush1.msra.mxu0 0.0
    %952 = vmatprep.subr.mxu0 0.0
    %953 = vmatpush1.msra.mxu0 0.0
    %954 = vmatprep.subr.mxu0 0.0
    %955 = vmatpush1.msra.mxu0 0.0
    %956 = vmatprep.subr.mxu0 0.0
    %957 = vmatpush1.msra.mxu0 0.0
    %958 = vmatprep.subr.mxu0 0.0
    %959 = vmatpush1.msra.mxu0 0.0
    %960 = vmatprep.subr.mxu0 0.0
    %961 = vmatpush1.msra.mxu0 0.0
    %962 = vmatprep.subr.mxu0 0.0
    %963 = vmatpush1.msra.mxu0 0.0
    %964 = vmatprep.subr.mxu0 0.0
    %965 = vmatpush1.msra.mxu0 0.0
    %966 = vmatprep.mubr.f32.mxu0 %v688
    %967 = vmatmul.mubr.f32.gmra.mrb[0].mxu0 %v418
    %v968 = vpop.f32.mrb[0].mxu0
    %v969 = vadd.f32 %v899, %v968
    %v970 = vpop.f32.mrb[0].mxu0
    %971 = vdwg.mxu0
    %v972 = vmax.f32 %v828, 0.0
    %v973 = vmax.f32 %v830, 0.0
    %v974 = vmax.f32 %v969, 0.0
    %v975 = vld [vmem:[%s8] sm:$0xff]
    %v976 = vld [vmem:[%s8 + $0x8] sm:$0xff]
    %v977 = vld [vmem:[%s8 + $0x10] sm:$0xff]
    %v978 = vld [vmem:[%s8 + $0x18] sm:$0xff]
    %v979 = vunpack.c.l.bf16 %v975
    %v980 = vunpack.c.h.bf16 %v975
    %v981 = vunpack.c.l.bf16 %v976
    %v982 = vunpack.c.h.bf16 %v976
    %v983 = vunpack.c.l.bf16 %v977
    %v984 = vunpack.c.h.bf16 %v977
    %v985 = vunpack.c.l.bf16 %v978
    %v986 = vunpack.c.h.bf16 %v978
    %v987 = vld [vmem:[%s9] sm:$0xff]
    %v988 = vld [vmem:[%s9 + $0x8] sm:$0xff]
    %v989 = vunpack.c.l.bf16 %v987
    %v990 = vunpack.c.h.bf16 %v987
    %v991 = vunpack.c.l.bf16 %v988
    %v992 = vunpack.c.h.bf16 %v988
    %993 = vmatprep.subr.mxu0 %v990
    %994 = vmatpush1.msra.mxu0 %v989
    %995 = vmatprep.subr.mxu0 0.0
    %996 = vmatpush1.msra.mxu0 0.0
    %997 = vmatprep.subr.mxu0 0.0
    %998 = vmatpush1.msra.mxu0 0.0
    %999 = vmatprep.subr.mxu0 0.0
    %1000 = vmatpush1.msra.mxu0 0.0
    %1001 = vmatprep.subr.mxu0 0.0
    %1002 = vmatpush1.msra.mxu0 0.0
    %1003 = vmatprep.subr.mxu0 0.0
    %1004 = vmatpush1.msra.mxu0 0.0
    %1005 = vmatprep.subr.mxu0 0.0
    %1006 = vmatpush1.msra.mxu0 0.0
    %1007 = vmatprep.subr.mxu0 0.0
    %1008 = vmatpush1.msra.mxu0 0.0
    %1009 = vmatprep.subr.mxu0 0.0
    %1010 = vmatpush1.msra.mxu0 0.0
    %1011 = vmatprep.subr.mxu0 0.0
    %1012 = vmatpush1.msra.mxu0 0.0
    %1013 = vmatprep.subr.mxu0 0.0
    %1014 = vmatpush1.msra.mxu0 0.0
    %1015 = vmatprep.subr.mxu0 0.0
    %1016 = vmatpush1.msra.mxu0 0.0
    %1017 = vmatprep.subr.mxu0 0.0
    %1018 = vmatpush1.msra.mxu0 0.0
    %1019 = vmatprep.subr.mxu0 0.0
    %1020 = vmatpush1.msra.mxu0 0.0
    %1021 = vmatprep.subr.mxu0 0.0
    %1022 = vmatpush1.msra.mxu0 0.0
    %1023 = vmatprep.subr.mxu0 0.0
    %1024 = vmatpush1.msra.mxu0 0.0
    %1025 = vmatprep.subr.mxu0 0.0
    %1026 = vmatpush1.msra.mxu0 0.0
    %1027 = vmatprep.subr.mxu0 0.0
    %1028 = vmatpush1.msra.mxu0 0.0
    %1029 = vmatprep.subr.mxu0 0.0
    %1030 = vmatpush1.msra.mxu0 0.0
    %1031 = vmatprep.subr.mxu0 0.0
    %1032 = vmatpush1.msra.mxu0 0.0
    %1033 = vmatprep.subr.mxu0 0.0
    %1034 = vmatpush1.msra.mxu0 0.0
    %1035 = vmatprep.subr.mxu0 0.0
    %1036 = vmatpush1.msra.mxu0 0.0
    %1037 = vmatprep.subr.mxu0 0.0
    %1038 = vmatpush1.msra.mxu0 0.0
    %1039 = vmatprep.subr.mxu0 0.0
    %1040 = vmatpush1.msra.mxu0 0.0
    %1041 = vmatprep.subr.mxu0 0.0
    %1042 = vmatpush1.msra.mxu0 0.0
    %1043 = vmatprep.subr.mxu0 0.0
    %1044 = vmatpush1.msra.mxu0 0.0
    %1045 = vmatprep.subr.mxu0 0.0
    %1046 = vmatpush1.msra.mxu0 0.0
    %1047 = vmatprep.subr.mxu0 0.0
    %1048 = vmatpush1.msra.mxu0 0.0
    %1049 = vmatprep.subr.mxu0 0.0
    %1050 = vmatpush1.msra.mxu0 0.0
    %1051 = vmatprep.subr.mxu0 0.0
    %1052 = vmatpush1.msra.mxu0 0.0
    %1053 = vmatprep.subr.mxu0 0.0
    %1054 = vmatpush1.msra.mxu0 0.0
    %1055 = vmatprep.subr.mxu0 0.0
    %1056 = vmatpush1.msra.mxu0 0.0
    %1057 = vmatprep.mubr.f32.mxu0 0.0
    %1058 = vmatmul.mubr.f32.gmra.mrb[0].mxu0 %v100
    %v1059 = vpop.f32.mrb[0].mxu0
    %v1060 = vadd.f32 0.0, %v1059
    %v1061 = vpop.f32.mrb[0].mxu0
    %v1062 = vadd.f32 0.0, %v1061
    %1063 = vdwg.mxu0
    %1064 = vmatprep.subr.mxu0 %v992
    %1065 = vmatpush1.msra.mxu0 %v991
    %1066 = vmatprep.subr.mxu0 0.0
    %1067 = vmatpush1.msra.mxu0 0.0
    %1068 = vmatprep.subr.mxu0 0.0
    %1069 = vmatpush1.msra.mxu0 0.0
    %1070 = vmatprep.subr.mxu0 0.0
    %1071 = vmatpush1.msra.mxu0 0.0
    %1072 = vmatprep.subr.mxu0 0.0
    %1073 = vmatpush1.msra.mxu0 0.0
    %1074 = vmatprep.subr.mxu0 0.0
    %1075 = vmatpush1.msra.mxu0 0.0
    %1076 = vmatprep.subr.mxu0 0.0
    %1077 = vmatpush1.msra.mxu0 0.0
    %1078 = vmatprep.subr.mxu0 0.0
    %1079 = vmatpush1.msra.mxu0 0.0
    %1080 = vmatprep.subr.mxu0 0.0
    %1081 = vmatpush1.msra.mxu0 0.0
    %1082 = vmatprep.subr.mxu0 0.0
    %1083 = vmatpush1.msra.mxu0 0.0
    %1084 = vmatprep.subr.mxu0 0.0
    %1085 = vmatpush1.msra.mxu0 0.0
    %1086 = vmatprep.subr.mxu0 0.0
    %1087 = vmatpush1.msra.mxu0 0.0
    %1088 = vmatprep.subr.mxu0 0.0
    %1089 = vmatpush1.msra.mxu0 0.0
    %1090 = vmatprep.subr.mxu0 0.0
    %1091 = vmatpush1.msra.mxu0 0.0
    %1092 = vmatprep.subr.mxu0 0.0
    %1093 = vmatpush1.msra.mxu0 0.0
    %1094 = vmatprep.subr.mxu0 0.0
    %1095 = vmatpush1.msra.mxu0 0.0
    %1096 = vmatprep.subr.mxu0 0.0
    %1097 = vmatpush1.msra.mxu0 0.0
    %1098 = vmatprep.subr.mxu0 0.0
    %1099 = vmatpush1.msra.mxu0 0.0
    %1100 = vmatprep.subr.mxu0 0.0
    %1101 = vmatpush1.msra.mxu0 0.0
    %1102 = vmatprep.subr.mxu0 0.0
    %1103 = vmatpush1.msra.mxu0 0.0
    %1104 = vmatprep.subr.mxu0 0.0
    %1105 = vmatpush1.msra.mxu0 0.0
    %1106 = vmatprep.subr.mxu0 0.0
    %1107 = vmatpush1.msra.mxu0 0.0
    %1108 = vmatprep.subr.mxu0 0.0
    %1109 = vmatpush1.msra.mxu0 0.0
    %1110 = vmatprep.subr.mxu0 0.0
    %1111 = vmatpush1.msra.mxu0 0.0
    %1112 = vmatprep.subr.mxu0 0.0
    %1113 = vmatpush1.msra.mxu0 0.0
    %1114 = vmatprep.subr.mxu0 0.0
    %1115 = vmatpush1.msra.mxu0 0.0
    %1116 = vmatprep.subr.mxu0 0.0
    %1117 = vmatpush1.msra.mxu0 0.0
    %1118 = vmatprep.subr.mxu0 0.0
    %1119 = vmatpush1.msra.mxu0 0.0
    %1120 = vmatprep.subr.mxu0 0.0
    %1121 = vmatpush1.msra.mxu0 0.0
    %1122 = vmatprep.subr.mxu0 0.0
    %1123 = vmatpush1.msra.mxu0 0.0
    %1124 = vmatprep.subr.mxu0 0.0
    %1125 = vmatpush1.msra.mxu0 0.0
    %1126 = vmatprep.subr.mxu0 0.0
    %1127 = vmatpush1.msra.mxu0 0.0
    %1128 = vmatprep.mubr.f32.mxu0 0.0
    %1129 = vmatmul.mubr.f32.gmra.mrb[0].mxu0 %v100
    %v1130 = vpop.f32.mrb[0].mxu0
    %v1131 = vadd.f32 0.0, %v1130
    %v1132 = vpop.f32.mrb[0].mxu0
    %v1133 = vadd.f32 0.0, %v1132
    %1134 = vdwg.mxu0
    %1135 = vmatprep.subr.mxu0 %v980
    %1136 = vmatpush1.msra.mxu0 %v979
    %1137 = vmatprep.subr.mxu0 %v984
    %1138 = vmatpush1.msra.mxu0 %v983
    %1139 = vmatprep.subr.mxu0 0.0
    %1140 = vmatpush1.msra.mxu0 0.0
    %1141 = vmatprep.subr.mxu0 0.0
    %1142 = vmatpush1.msra.mxu0 0.0
    %1143 = vmatprep.subr.mxu0 0.0
    %1144 = vmatpush1.msra.mxu0 0.0
    %1145 = vmatprep.subr.mxu0 0.0
    %1146 = vmatpush1.msra.mxu0 0.0
    %1147 = vmatprep.subr.mxu0 0.0
    %1148 = vmatpush1.msra.mxu0 0.0
    %1149 = vmatprep.subr.mxu0 0.0
    %1150 = vmatpush1.msra.mxu0 0.0
    %1151 = vmatprep.subr.mxu0 0.0
    %1152 = vmatpush1.msra.mxu0 0.0
    %1153 = vmatprep.subr.mxu0 0.0
    %1154 = vmatpush1.msra.mxu0 0.0
    %1155 = vmatprep.subr.mxu0 0.0
    %1156 = vmatpush1.msra.mxu0 0.0
    %1157 = vmatprep.subr.mxu0 0.0
    %1158 = vmatpush1.msra.mxu0 0.0
    %1159 = vmatprep.subr.mxu0 0.0
    %1160 = vmatpush1.msra.mxu0 0.0
    %1161 = vmatprep.subr.mxu0 0.0
    %1162 = vmatpush1.msra.mxu0 0.0
    %1163 = vmatprep.subr.mxu0 0.0
    %1164 = vmatpush1.msra.mxu0 0.0
    %1165 = vmatprep.subr.mxu0 0.0
    %1166 = vmatpush1.msra.mxu0 0.0
    %1167 = vmatprep.subr.mxu0 0.0
    %1168 = vmatpush1.msra.mxu0 0.0
    %1169 = vmatprep.subr.mxu0 0.0
    %1170 = vmatpush1.msra.mxu0 0.0
    %1171 = vmatprep.subr.mxu0 0.0
    %1172 = vmatpush1.msra.mxu0 0.0
    %1173 = vmatprep.subr.mxu0 0.0
    %1174 = vmatpush1.msra.mxu0 0.0
    %1175 = vmatprep.subr.mxu0 0.0
    %1176 = vmatpush1.msra.mxu0 0.0
    %1177 = vmatprep.subr.mxu0 0.0
    %1178 = vmatpush1.msra.mxu0 0.0
    %1179 = vmatprep.subr.mxu0 0.0
    %1180 = vmatpush1.msra.mxu0 0.0
    %1181 = vmatprep.subr.mxu0 0.0
    %1182 = vmatpush1.msra.mxu0 0.0
    %1183 = vmatprep.subr.mxu0 0.0
    %1184 = vmatpush1.msra.mxu0 0.0
    %1185 = vmatprep.subr.mxu0 0.0
    %1186 = vmatpush1.msra.mxu0 0.0
    %1187 = vmatprep.subr.mxu0 0.0
    %1188 = vmatpush1.msra.mxu0 0.0
    %1189 = vmatprep.subr.mxu0 0.0
    %1190 = vmatpush1.msra.mxu0 0.0
    %1191 = vmatprep.subr.mxu0 0.0
    %1192 = vmatpush1.msra.mxu0 0.0
    %1193 = vmatprep.subr.mxu0 0.0
    %1194 = vmatpush1.msra.mxu0 0.0
    %1195 = vmatprep.subr.mxu0 0.0
    %1196 = vmatpush1.msra.mxu0 0.0
    %1197 = vmatprep.subr.mxu0 0.0
    %1198 = vmatpush1.msra.mxu0 0.0
    %1199 = vmatprep.mubr.f32.mxu0 0.0
    %1200 = vmatmul.mubr.f32.gmra.mrb[0].mxu0 %v246
    %v1201 = vpop.f32.mrb[0].mxu0
    %v1202 = vadd.f32 %v1060, %v1201
    %v1203 = vpop.f32.mrb[0].mxu0
    %v1204 = vadd.f32 %v1062, %v1203
    %1205 = vdwg.mxu0
    %1206 = vmatprep.subr.mxu0 %v982
    %1207 = vmatpush1.msra.mxu0 %v981
    %1208 = vmatprep.subr.mxu0 %v986
    %1209 = vmatpush1.msra.mxu0 %v985
    %1210 = vmatprep.subr.mxu0 0.0
    %1211 = vmatpush1.msra.mxu0 0.0
    %1212 = vmatprep.subr.mxu0 0.0
    %1213 = vmatpush1.msra.mxu0 0.0
    %1214 = vmatprep.subr.mxu0 0.0
    %1215 = vmatpush1.msra.mxu0 0.0
    %1216 = vmatprep.subr.mxu0 0.0
    %1217 = vmatpush1.msra.mxu0 0.0
    %1218 = vmatprep.subr.mxu0 0.0
    %1219 = vmatpush1.msra.mxu0 0.0
    %1220 = vmatprep.subr.mxu0 0.0
    %1221 = vmatpush1.msra.mxu0 0.0
    %1222 = vmatprep.subr.mxu0 0.0
    %1223 = vmatpush1.msra.mxu0 0.0
    %1224 = vmatprep.subr.mxu0 0.0
    %1225 = vmatpush1.msra.mxu0 0.0
    %1226 = vmatprep.subr.mxu0 0.0
    %1227 = vmatpush1.msra.mxu0 0.0
    %1228 = vmatprep.subr.mxu0 0.0
    %1229 = vmatpush1.msra.mxu0 0.0
    %1230 = vmatprep.subr.mxu0 0.0
    %1231 = vmatpush1.msra.mxu0 0.0
    %1232 = vmatprep.subr.mxu0 0.0
    %1233 = vmatpush1.msra.mxu0 0.0
    %1234 = vmatprep.subr.mxu0 0.0
    %1235 = vmatpush1.msra.mxu0 0.0
    %1236 = vmatprep.subr.mxu0 0.0
    %1237 = vmatpush1.msra.mxu0 0.0
    %1238 = vmatprep.subr.mxu0 0.0
    %1239 = vmatpush1.msra.mxu0 0.0
    %1240 = vmatprep.subr.mxu0 0.0
    %1241 = vmatpush1.msra.mxu0 0.0
    %1242 = vmatprep.subr.mxu0 0.0
    %1243 = vmatpush1.msra.mxu0 0.0
    %1244 = vmatprep.subr.mxu0 0.0
    %1245 = vmatpush1.msra.mxu0 0.0
    %1246 = vmatprep.subr.mxu0 0.0
    %1247 = vmatpush1.msra.mxu0 0.0
    %1248 = vmatprep.subr.mxu0 0.0
    %1249 = vmatpush1.msra.mxu0 0.0
    %1250 = vmatprep.subr.mxu0 0.0
    %1251 = vmatpush1.msra.mxu0 0.0
    %1252 = vmatprep.subr.mxu0 0.0
    %1253 = vmatpush1.msra.mxu0 0.0
    %1254 = vmatprep.subr.mxu0 0.0
    %1255 = vmatpush1.msra.mxu0 0.0
    %1256 = vmatprep.subr.mxu0 0.0
    %1257 = vmatpush1.msra.mxu0 0.0
    %1258 = vmatprep.subr.mxu0 0.0
    %1259 = vmatpush1.msra.mxu0 0.0
    %1260 = vmatprep.subr.mxu0 0.0
    %1261 = vmatpush1.msra.mxu0 0.0
    %1262 = vmatprep.subr.mxu0 0.0
    %1263 = vmatpush1.msra.mxu0 0.0
    %1264 = vmatprep.subr.mxu0 0.0
    %1265 = vmatpush1.msra.mxu0 0.0
    %1266 = vmatprep.subr.mxu0 0.0
    %1267 = vmatpush1.msra.mxu0 0.0
    %1268 = vmatprep.subr.mxu0 0.0
    %1269 = vmatpush1.msra.mxu0 0.0
    %1270 = vmatprep.mubr.f32.mxu0 0.0
    %1271 = vmatmul.mubr.f32.gmra.mrb[0].mxu0 %v246
    %v1272 = vpop.f32.mrb[0].mxu0
    %v1273 = vadd.f32 %v1131, %v1272
    %v1274 = vpop.f32.mrb[0].mxu0
    %v1275 = vadd.f32 %v1133, %v1274
    %1276 = vdwg.mxu0
    %v1277 = vld [vmem:[%s10] sm:$0xf]
    %v1279 = vlaneseq
    %v1280 = vshrl.u32 %v1279, 7
    %v1281 = vsub.s32 0, %v1280
    %v1282 = vrot.slane %v1277, %v1281
    %v1283 = vlaneseq
    %v1284 = vshrl.u32 %v1283, 7
    %v1285 = vsub.s32 1, %v1284
    %v1286 = vrot.slane %v1277, %v1285
    %v1287 = vlaneseq
    %v1288 = vshrl.u32 %v1287, 7
    %v1289 = vsub.s32 2, %v1288
    %v1290 = vrot.slane %v1277, %v1289
    %v1291 = vlaneseq
    %v1292 = vshrl.u32 %v1291, 7
    %v1293 = vsub.s32 3, %v1292
    %v1294 = vrot.slane %v1277, %v1293
    %v1299 = vadd.f32 %v1202, %v1282
    %v1300 = vadd.f32 %v1204, %v1286
    %v1301 = vadd.f32 %v1273, %v1290
    %v1302 = vadd.f32 %v1275, %v1294
    %v1303 = vmax.f32 %v1299, 0.0
    %v1304 = vmax.f32 %v1300, 0.0
    %v1305 = vmax.f32 %v1301, 0.0
    %v1306 = vmax.f32 %v1302, 0.0
    %v1307 = vld [vmem:[#allocation4] sm:$0xff]
    %v1308 = vld [vmem:[#allocation4 + $0x8] sm:$0xf]
    %v1309 = vld [vmem:[#allocation4 + $0xc] sm:$0xff]
    %v1310 = vld [vmem:[#allocation4 + $0x14] sm:$0xf]
    %v1311 = vld [vmem:[#allocation4 + $0x18] sm:$0xff]
    %v1312 = vld [vmem:[#allocation4 + $0x20] sm:$0xf]
    %v1313 = vld [vmem:[#allocation4 + $0x24] sm:$0xff]
    %v1314 = vld [vmem:[#allocation4 + $0x2c] sm:$0xf]
    %v1315 = vld [vmem:[#allocation4 + $0x30] sm:$0xff]
    %v1316 = vld [vmem:[#allocation4 + $0x38] sm:$0xf]
    %v1317 = vld [vmem:[#allocation4 + $0x3c] sm:$0xff]
    %v1318 = vld [vmem:[#allocation4 + $0x44] sm:$0xf]
    %v1319 = vld [vmem:[#allocation4 + $0x48] sm:$0xff]
    %v1320 = vld [vmem:[#allocation4 + $0x50] sm:$0xf]
    %v1321 = vld [vmem:[#allocation4 + $0x54] sm:$0xff]
    %v1322 = vld [vmem:[#allocation4 + $0x5c] sm:$0xf]
    %v1323 = vld [vmem:[#allocation4 + $0x60] sm:$0xff]
    %v1324 = vld [vmem:[#allocation4 + $0x68] sm:$0xf]
    %v1325 = vld [vmem:[#allocation4 + $0x6c] sm:$0xff]
    %v1326 = vld [vmem:[#allocation4 + $0x74] sm:$0xf]
    %v1327 = vld [vmem:[#allocation4 + $0x78] sm:$0xff]
    %v1328 = vld [vmem:[#allocation4 + $0x80] sm:$0xf]
    %v1329 = vld [vmem:[#allocation4 + $0x84] sm:$0xff]
    %v1330 = vld [vmem:[#allocation4 + $0x8c] sm:$0xf]
    %v1331 = vld [vmem:[#allocation4 + $0x90] sm:$0xff]
    %v1332 = vld [vmem:[#allocation4 + $0x98] sm:$0xf]
    %v1333 = vld [vmem:[#allocation4 + $0x9c] sm:$0xff]
    %v1334 = vld [vmem:[#allocation4 + $0xa4] sm:$0xf]
    %v1335 = vld [vmem:[#allocation4 + $0xa8] sm:$0xff]
    %v1336 = vld [vmem:[#allocation4 + $0xb0] sm:$0xf]
    %v1337 = vld [vmem:[#allocation4 + $0xb4] sm:$0xff]
    %v1338 = vld [vmem:[#allocation4 + $0xbc] sm:$0xf]
    %v1339 = vld [vmem:[#allocation4 + $0xc0] sm:$0xff]
    %v1340 = vld [vmem:[#allocation4 + $0xc8] sm:$0xf]
    %v1341 = vld [vmem:[#allocation4 + $0xcc] sm:$0xff]
    %v1342 = vld [vmem:[#allocation4 + $0xd4] sm:$0xf]
    %v1343 = vld [vmem:[#allocation4 + $0xd8] sm:$0xff]
    %v1344 = vld [vmem:[#allocation4 + $0xe0] sm:$0xf]
    %v1345 = vld [vmem:[#allocation4 + $0xe4] sm:$0xff]
    %v1346 = vld [vmem:[#allocation4 + $0xec] sm:$0xf]
    %v1347 = vld [vmem:[#allocation4 + $0xf0] sm:$0xff]
    %v1348 = vld [vmem:[#allocation4 + $0xf8] sm:$0xf]
    %v1349 = vld [vmem:[#allocation4 + $0xfc] sm:$0xff]
    %v1350 = vld [vmem:[#allocation4 + $0x104] sm:$0xf]
    %v1351 = vld [vmem:[#allocation4 + $0x108] sm:$0xff]
    %v1352 = vld [vmem:[#allocation4 + $0x110] sm:$0xf]
    %v1353 = vld [vmem:[#allocation4 + $0x114] sm:$0xff]
    %v1354 = vld [vmem:[#allocation4 + $0x11c] sm:$0xf]
    %v1355 = vld [vmem:[#allocation4 + $0x120] sm:$0xff]
    %v1356 = vld [vmem:[#allocation4 + $0x128] sm:$0xf]
    %v1357 = vld [vmem:[#allocation4 + $0x12c] sm:$0xff]
    %v1358 = vld [vmem:[#allocation4 + $0x134] sm:$0xf]
    %v1359 = vld [vmem:[#allocation4 + $0x138] sm:$0xff]
    %v1360 = vld [vmem:[#allocation4 + $0x140] sm:$0xf]
    %v1361 = vld [vmem:[#allocation4 + $0x144] sm:$0xff]
    %v1362 = vld [vmem:[#allocation4 + $0x14c] sm:$0xf]
    %v1363 = vld [vmem:[#allocation4 + $0x150] sm:$0xff]
    %v1364 = vld [vmem:[#allocation4 + $0x158] sm:$0xf]
    %v1365 = vld [vmem:[#allocation4 + $0x15c] sm:$0xff]
    %v1366 = vld [vmem:[#allocation4 + $0x164] sm:$0xf]
    %v1367 = vld [vmem:[#allocation4 + $0x168] sm:$0xff]
    %v1368 = vld [vmem:[#allocation4 + $0x170] sm:$0xf]
    %v1369 = vld [vmem:[#allocation4 + $0x174] sm:$0xff]
    %v1370 = vld [vmem:[#allocation4 + $0x17c] sm:$0xf]
    %v1371 = vld [vmem:[#allocation4 + $0x180] sm:$0xff]
    %v1372 = vld [vmem:[#allocation4 + $0x188] sm:$0xf]
    %v1373 = vld [vmem:[#allocation4 + $0x18c] sm:$0xff]
    %v1374 = vld [vmem:[#allocation4 + $0x194] sm:$0xf]
    %v1375 = vld [vmem:[#allocation4 + $0x198] sm:$0xff]
    %v1376 = vld [vmem:[#allocation4 + $0x1a0] sm:$0xf]
    %v1377 = vld [vmem:[#allocation4 + $0x1a4] sm:$0xff]
    %v1378 = vld [vmem:[#allocation4 + $0x1ac] sm:$0xf]
    %v1379 = vld [vmem:[#allocation4 + $0x1b0] sm:$0xff]
    %v1380 = vld [vmem:[#allocation4 + $0x1b8] sm:$0xf]
    %v1381 = vld [vmem:[#allocation4 + $0x1bc] sm:$0xff]
    %v1382 = vld [vmem:[#allocation4 + $0x1c4] sm:$0xf]
    %v1383 = vld [vmem:[#allocation4 + $0x1c8] sm:$0xff]
    %v1384 = vld [vmem:[#allocation4 + $0x1d0] sm:$0xf]
    %v1385 = vld [vmem:[#allocation4 + $0x1d4] sm:$0xff]
    %v1386 = vld [vmem:[#allocation4 + $0x1dc] sm:$0xf]
    %v1387 = vld [vmem:[#allocation4 + $0x1e0] sm:$0xff]
    %v1388 = vld [vmem:[#allocation4 + $0x1e8] sm:$0xf]
    %v1389 = vld [vmem:[#allocation4 + $0x1ec] sm:$0xff]
    %v1390 = vld [vmem:[#allocation4 + $0x1f4] sm:$0xf]
    %v1391 = vld [vmem:[#allocation4 + $0x1f8] sm:$0xff]
    %v1392 = vld [vmem:[#allocation4 + $0x200] sm:$0xf]
    %v1393 = vld [vmem:[#allocation4 + $0x204] sm:$0xff]
    %v1394 = vld [vmem:[#allocation4 + $0x20c] sm:$0xf]
    %v1395 = vld [vmem:[#allocation4 + $0x210] sm:$0xff]
    %v1396 = vld [vmem:[#allocation4 + $0x218] sm:$0xf]
    %v1397 = vld [vmem:[#allocation4 + $0x21c] sm:$0xff]
    %v1398 = vld [vmem:[#allocation4 + $0x224] sm:$0xf]
    %v1399 = vld [vmem:[#allocation4 + $0x228] sm:$0xff]
    %v1400 = vld [vmem:[#allocation4 + $0x230] sm:$0xf]
    %v1401 = vld [vmem:[#allocation4 + $0x234] sm:$0xff]
    %v1402 = vld [vmem:[#allocation4 + $0x23c] sm:$0xf]
    %v1403 = vld [vmem:[#allocation4 + $0x240] sm:$0xff]
    %v1404 = vld [vmem:[#allocation4 + $0x248] sm:$0xf]
    %v1405 = vld [vmem:[#allocation4 + $0x24c] sm:$0xff]
    %v1406 = vld [vmem:[#allocation4 + $0x254] sm:$0xf]
    %v1407 = vunpack.c.l.bf16 %v1307
    %v1408 = vunpack.c.h.bf16 %v1307
    %v1409 = vunpack.c.l.bf16 %v1308
    %v1410 = vunpack.c.l.bf16 %v1309
    %v1411 = vunpack.c.h.bf16 %v1309
    %v1412 = vunpack.c.l.bf16 %v1310
    %v1413 = vunpack.c.l.bf16 %v1311
    %v1414 = vunpack.c.h.bf16 %v1311
    %v1415 = vunpack.c.l.bf16 %v1312
    %v1416 = vunpack.c.l.bf16 %v1313
    %v1417 = vunpack.c.h.bf16 %v1313
    %v1418 = vunpack.c.l.bf16 %v1314
    %v1419 = vunpack.c.l.bf16 %v1315
    %v1420 = vunpack.c.h.bf16 %v1315
    %v1421 = vunpack.c.l.bf16 %v1316
    %v1422 = vunpack.c.l.bf16 %v1317
    %v1423 = vunpack.c.h.bf16 %v1317
    %v1424 = vunpack.c.l.bf16 %v1318
    %v1425 = vunpack.c.l.bf16 %v1319
    %v1426 = vunpack.c.h.bf16 %v1319
    %v1427 = vunpack.c.l.bf16 %v1320
    %v1428 = vunpack.c.l.bf16 %v1321
    %v1429 = vunpack.c.h.bf16 %v1321
    %v1430 = vunpack.c.l.bf16 %v1322
    %v1431 = vunpack.c.l.bf16 %v1323
    %v1432 = vunpack.c.h.bf16 %v1323
    %v1433 = vunpack.c.l.bf16 %v1324
    %v1434 = vunpack.c.l.bf16 %v1325
    %v1435 = vunpack.c.h.bf16 %v1325
    %v1436 = vunpack.c.l.bf16 %v1326
    %v1437 = vunpack.c.l.bf16 %v1327
    %v1438 = vunpack.c.h.bf16 %v1327
    %v1439 = vunpack.c.l.bf16 %v1328
    %v1440 = vunpack.c.l.bf16 %v1329
    %v1441 = vunpack.c.h.bf16 %v1329
    %v1442 = vunpack.c.l.bf16 %v1330
    %v1443 = vunpack.c.l.bf16 %v1331
    %v1444 = vunpack.c.h.bf16 %v1331
    %v1445 = vunpack.c.l.bf16 %v1332
    %v1446 = vunpack.c.l.bf16 %v1333
    %v1447 = vunpack.c.h.bf16 %v1333
    %v1448 = vunpack.c.l.bf16 %v1334
    %v1449 = vunpack.c.l.bf16 %v1335
    %v1450 = vunpack.c.h.bf16 %v1335
    %v1451 = vunpack.c.l.bf16 %v1336
    %v1452 = vunpack.c.l.bf16 %v1337
    %v1453 = vunpack.c.h.bf16 %v1337
    %v1454 = vunpack.c.l.bf16 %v1338
    %v1455 = vunpack.c.l.bf16 %v1339
    %v1456 = vunpack.c.h.bf16 %v1339
    %v1457 = vunpack.c.l.bf16 %v1340
    %v1458 = vunpack.c.l.bf16 %v1341
    %v1459 = vunpack.c.h.bf16 %v1341
    %v1460 = vunpack.c.l.bf16 %v1342
    %v1461 = vunpack.c.l.bf16 %v1343
    %v1462 = vunpack.c.h.bf16 %v1343
    %v1463 = vunpack.c.l.bf16 %v1344
    %v1464 = vunpack.c.l.bf16 %v1345
    %v1465 = vunpack.c.h.bf16 %v1345
    %v1466 = vunpack.c.l.bf16 %v1346
    %v1467 = vunpack.c.l.bf16 %v1347
    %v1468 = vunpack.c.h.bf16 %v1347
    %v1469 = vunpack.c.l.bf16 %v1348
    %v1470 = vunpack.c.l.bf16 %v1349
    %v1471 = vunpack.c.h.bf16 %v1349
    %v1472 = vunpack.c.l.bf16 %v1350
    %v1473 = vunpack.c.l.bf16 %v1351
    %v1474 = vunpack.c.h.bf16 %v1351
    %v1475 = vunpack.c.l.bf16 %v1352
    %v1476 = vunpack.c.l.bf16 %v1353
    %v1477 = vunpack.c.h.bf16 %v1353
    %v1478 = vunpack.c.l.bf16 %v1354
    %v1479 = vunpack.c.l.bf16 %v1355
    %v1480 = vunpack.c.h.bf16 %v1355
    %v1481 = vunpack.c.l.bf16 %v1356
    %v1482 = vunpack.c.l.bf16 %v1357
    %v1483 = vunpack.c.h.bf16 %v1357
    %v1484 = vunpack.c.l.bf16 %v1358
    %v1485 = vunpack.c.l.bf16 %v1359
    %v1486 = vunpack.c.h.bf16 %v1359
    %v1487 = vunpack.c.l.bf16 %v1360
    %v1488 = vunpack.c.l.bf16 %v1361
    %v1489 = vunpack.c.h.bf16 %v1361
    %v1490 = vunpack.c.l.bf16 %v1362
    %v1491 = vunpack.c.l.bf16 %v1363
    %v1492 = vunpack.c.h.bf16 %v1363
    %v1493 = vunpack.c.l.bf16 %v1364
    %v1494 = vunpack.c.l.bf16 %v1365
    %v1495 = vunpack.c.h.bf16 %v1365
    %v1496 = vunpack.c.l.bf16 %v1366
    %v1497 = vunpack.c.l.bf16 %v1367
    %v1498 = vunpack.c.h.bf16 %v1367
    %v1499 = vunpack.c.l.bf16 %v1368
    %v1500 = vunpack.c.l.bf16 %v1369
    %v1501 = vunpack.c.h.bf16 %v1369
    %v1502 = vunpack.c.l.bf16 %v1370
    %v1503 = vunpack.c.l.bf16 %v1371
    %v1504 = vunpack.c.h.bf16 %v1371
    %v1505 = vunpack.c.l.bf16 %v1372
    %v1506 = vunpack.c.l.bf16 %v1373
    %v1507 = vunpack.c.h.bf16 %v1373
    %v1508 = vunpack.c.l.bf16 %v1374
    %v1509 = vunpack.c.l.bf16 %v1375
    %v1510 = vunpack.c.h.bf16 %v1375
    %v1511 = vunpack.c.l.bf16 %v1376
    %v1512 = vunpack.c.l.bf16 %v1377
    %v1513 = vunpack.c.h.bf16 %v1377
    %v1514 = vunpack.c.l.bf16 %v1378
    %v1515 = vunpack.c.l.bf16 %v1379
    %v1516 = vunpack.c.h.bf16 %v1379
    %v1517 = vunpack.c.l.bf16 %v1380
    %v1518 = vunpack.c.l.bf16 %v1381
    %v1519 = vunpack.c.h.bf16 %v1381
    %v1520 = vunpack.c.l.bf16 %v1382
    %v1521 = vunpack.c.l.bf16 %v1383
    %v1522 = vunpack.c.h.bf16 %v1383
    %v1523 = vunpack.c.l.bf16 %v1384
    %v1524 = vunpack.c.l.bf16 %v1385
    %v1525 = vunpack.c.h.bf16 %v1385
    %v1526 = vunpack.c.l.bf16 %v1386
    %v1527 = vunpack.c.l.bf16 %v1387
    %v1528 = vunpack.c.h.bf16 %v1387
    %v1529 = vunpack.c.l.bf16 %v1388
    %v1530 = vunpack.c.l.bf16 %v1389
    %v1531 = vunpack.c.h.bf16 %v1389
    %v1532 = vunpack.c.l.bf16 %v1390
    %v1533 = vunpack.c.l.bf16 %v1391
    %v1534 = vunpack.c.h.bf16 %v1391
    %v1535 = vunpack.c.l.bf16 %v1392
    %v1536 = vunpack.c.l.bf16 %v1393
    %v1537 = vunpack.c.h.bf16 %v1393
    %v1538 = vunpack.c.l.bf16 %v1394
    %v1539 = vunpack.c.l.bf16 %v1395
    %v1540 = vunpack.c.h.bf16 %v1395
    %v1541 = vunpack.c.l.bf16 %v1396
    %v1542 = vunpack.c.l.bf16 %v1397
    %v1543 = vunpack.c.h.bf16 %v1397
    %v1544 = vunpack.c.l.bf16 %v1398
    %v1545 = vunpack.c.l.bf16 %v1399
    %v1546 = vunpack.c.h.bf16 %v1399
    %v1547 = vunpack.c.l.bf16 %v1400
    %v1548 = vunpack.c.l.bf16 %v1401
    %v1549 = vunpack.c.h.bf16 %v1401
    %v1550 = vunpack.c.l.bf16 %v1402
    %v1551 = vunpack.c.l.bf16 %v1403
    %v1552 = vunpack.c.h.bf16 %v1403
    %v1553 = vunpack.c.l.bf16 %v1404
    %v1554 = vunpack.c.l.bf16 %v1405
    %v1555 = vunpack.c.h.bf16 %v1405
    %v1556 = vunpack.c.l.bf16 %v1406
    %v1557 = vld [vmem:[%s12] sm:$0x7]
    %v1559 = vlaneseq
    %v1560 = vshrl.u32 %v1559, 7
    %v1561 = vsub.s32 0, %v1560
    %v1562 = vrot.slane %v1557, %v1561
    %v1563 = vlaneseq
    %v1564 = vshrl.u32 %v1563, 7
    %v1565 = vsub.s32 1, %v1564
    %v1566 = vrot.slane %v1557, %v1565
    %v1567 = vlaneseq
    %v1568 = vshrl.u32 %v1567, 7
    %v1569 = vsub.s32 2, %v1568
    %v1570 = vrot.slane %v1557, %v1569
    %v1575 = vsel %vm244, %v1306, 0
    %1577 = vmatprep.subr.mxu0 %v1408
    %1578 = vmatpush1.msra.mxu0 %v1407
    %1579 = vmatprep.subr.mxu0 %v1411
    %1580 = vmatpush1.msra.mxu0 %v1410
    %1581 = vmatprep.subr.mxu0 %v1414
    %1582 = vmatpush1.msra.mxu0 %v1413
    %1583 = vmatprep.subr.mxu0 %v1417
    %1584 = vmatpush1.msra.mxu0 %v1416
    %1585 = vmatprep.subr.mxu0 %v1420
    %1586 = vmatpush1.msra.mxu0 %v1419
    %1587 = vmatprep.subr.mxu0 %v1423
    %1588 = vmatpush1.msra.mxu0 %v1422
    %1589 = vmatprep.subr.mxu0 %v1426
    %1590 = vmatpush1.msra.mxu0 %v1425
    %1591 = vmatprep.subr.mxu0 %v1429
    %1592 = vmatpush1.msra.mxu0 %v1428
    %1593 = vmatprep.subr.mxu0 %v1432
    %1594 = vmatpush1.msra.mxu0 %v1431
    %1595 = vmatprep.subr.mxu0 %v1435
    %1596 = vmatpush1.msra.mxu0 %v1434
    %1597 = vmatprep.subr.mxu0 %v1438
    %1598 = vmatpush1.msra.mxu0 %v1437
    %1599 = vmatprep.subr.mxu0 %v1441
    %1600 = vmatpush1.msra.mxu0 %v1440
    %1601 = vmatprep.subr.mxu0 %v1444
    %1602 = vmatpush1.msra.mxu0 %v1443
    %1603 = vmatprep.subr.mxu0 %v1447
    %1604 = vmatpush1.msra.mxu0 %v1446
    %1605 = vmatprep.subr.mxu0 %v1450
    %1606 = vmatpush1.msra.mxu0 %v1449
    %1607 = vmatprep.subr.mxu0 %v1453
    %1608 = vmatpush1.msra.mxu0 %v1452
    %1609 = vmatprep.subr.mxu0 %v1456
    %1610 = vmatpush1.msra.mxu0 %v1455
    %1611 = vmatprep.subr.mxu0 %v1459
    %1612 = vmatpush1.msra.mxu0 %v1458
    %1613 = vmatprep.subr.mxu0 %v1462
    %1614 = vmatpush1.msra.mxu0 %v1461
    %1615 = vmatprep.subr.mxu0 %v1465
    %1616 = vmatpush1.msra.mxu0 %v1464
    %1617 = vmatprep.subr.mxu0 %v1468
    %1618 = vmatpush1.msra.mxu0 %v1467
    %1619 = vmatprep.subr.mxu0 %v1471
    %1620 = vmatpush1.msra.mxu0 %v1470
    %1621 = vmatprep.subr.mxu0 %v1474
    %1622 = vmatpush1.msra.mxu0 %v1473
    %1623 = vmatprep.subr.mxu0 %v1477
    %1624 = vmatpush1.msra.mxu0 %v1476
    %1625 = vmatprep.subr.mxu0 %v1480
    %1626 = vmatpush1.msra.mxu0 %v1479
    %1627 = vmatprep.subr.mxu0 %v1483
    %1628 = vmatpush1.msra.mxu0 %v1482
    %1629 = vmatprep.subr.mxu0 %v1486
    %1630 = vmatpush1.msra.mxu0 %v1485
    %1631 = vmatprep.subr.mxu0 %v1489
    %1632 = vmatpush1.msra.mxu0 %v1488
    %1633 = vmatprep.subr.mxu0 %v1492
    %1634 = vmatpush1.msra.mxu0 %v1491
    %1635 = vmatprep.subr.mxu0 %v1495
    %1636 = vmatpush1.msra.mxu0 %v1494
    %1637 = vmatprep.subr.mxu0 %v1498
    %1638 = vmatpush1.msra.mxu0 %v1497
    %1639 = vmatprep.subr.mxu0 %v1501
    %1640 = vmatpush1.msra.mxu0 %v1500
    %1641 = vmatprep.mubr.f32.mxu0 %v1304
    %1642 = vmatmul.mubr.f32.gmra.mrb[0].mxu0 %v1303
    %v1643 = vpop.f32.mrb[0].mxu0
    %v1644 = vadd.f32 %v1562, %v1643
    %v1645 = vpop.f32.mrb[0].mxu0
    %v1646 = vadd.f32 %v1566, %v1645
    %1647 = vdwg.mxu0
    %1648 = vmatprep.subr.mxu0 %v1504
    %1649 = vmatpush1.msra.mxu0 %v1503
    %1650 = vmatprep.subr.mxu0 %v1507
    %1651 = vmatpush1.msra.mxu0 %v1506
    %1652 = vmatprep.subr.mxu0 %v1510
    %1653 = vmatpush1.msra.mxu0 %v1509
    %1654 = vmatprep.subr.mxu0 %v1513
    %1655 = vmatpush1.msra.mxu0 %v1512
    %1656 = vmatprep.subr.mxu0 %v1516
    %1657 = vmatpush1.msra.mxu0 %v1515
    %1658 = vmatprep.subr.mxu0 %v1519
    %1659 = vmatpush1.msra.mxu0 %v1518
    %1660 = vmatprep.subr.mxu0 %v1522
    %1661 = vmatpush1.msra.mxu0 %v1521
    %1662 = vmatprep.subr.mxu0 %v1525
    %1663 = vmatpush1.msra.mxu0 %v1524
    %1664 = vmatprep.subr.mxu0 %v1528
    %1665 = vmatpush1.msra.mxu0 %v1527
    %1666 = vmatprep.subr.mxu0 %v1531
    %1667 = vmatpush1.msra.mxu0 %v1530
    %1668 = vmatprep.subr.mxu0 %v1534
    %1669 = vmatpush1.msra.mxu0 %v1533
    %1670 = vmatprep.subr.mxu0 %v1537
    %1671 = vmatpush1.msra.mxu0 %v1536
    %1672 = vmatprep.subr.mxu0 %v1540
    %1673 = vmatpush1.msra.mxu0 %v1539
    %1674 = vmatprep.subr.mxu0 %v1543
    %1675 = vmatpush1.msra.mxu0 %v1542
    %1676 = vmatprep.subr.mxu0 %v1546
    %1677 = vmatpush1.msra.mxu0 %v1545
    %1678 = vmatprep.subr.mxu0 %v1549
    %1679 = vmatpush1.msra.mxu0 %v1548
    %1680 = vmatprep.subr.mxu0 %v1552
    %1681 = vmatpush1.msra.mxu0 %v1551
    %1682 = vmatprep.subr.mxu0 %v1555
    %1683 = vmatpush1.msra.mxu0 %v1554
    %1684 = vmatprep.subr.mxu0 0.0
    %1685 = vmatpush1.msra.mxu0 0.0
    %1686 = vmatprep.subr.mxu0 0.0
    %1687 = vmatpush1.msra.mxu0 0.0
    %1688 = vmatprep.subr.mxu0 0.0
    %1689 = vmatpush1.msra.mxu0 0.0
    %1690 = vmatprep.subr.mxu0 0.0
    %1691 = vmatpush1.msra.mxu0 0.0
    %1692 = vmatprep.subr.mxu0 0.0
    %1693 = vmatpush1.msra.mxu0 0.0
    %1694 = vmatprep.subr.mxu0 0.0
    %1695 = vmatpush1.msra.mxu0 0.0
    %1696 = vmatprep.subr.mxu0 0.0
    %1697 = vmatpush1.msra.mxu0 0.0
    %1698 = vmatprep.subr.mxu0 0.0
    %1699 = vmatpush1.msra.mxu0 0.0
    %1700 = vmatprep.subr.mxu0 0.0
    %1701 = vmatpush1.msra.mxu0 0.0
    %1702 = vmatprep.subr.mxu0 0.0
    %1703 = vmatpush1.msra.mxu0 0.0
    %1704 = vmatprep.subr.mxu0 0.0
    %1705 = vmatpush1.msra.mxu0 0.0
    %1706 = vmatprep.subr.mxu0 0.0
    %1707 = vmatpush1.msra.mxu0 0.0
    %1708 = vmatprep.subr.mxu0 0.0
    %1709 = vmatpush1.msra.mxu0 0.0
    %1710 = vmatprep.subr.mxu0 0.0
    %1711 = vmatpush1.msra.mxu0 0.0
    %1712 = vmatprep.mubr.f32.mxu0 %v1575
    %1713 = vmatmul.mubr.f32.gmra.mrb[0].mxu0 %v1305
    %v1714 = vpop.f32.mrb[0].mxu0
    %v1715 = vadd.f32 %v1644, %v1714
    %v1716 = vpop.f32.mrb[0].mxu0
    %v1717 = vadd.f32 %v1646, %v1716
    %1718 = vdwg.mxu0
    %1719 = vmatprep.subr.mxu0 0.0
    %1720 = vmatpush1.msra.mxu0 %v1409
    %1721 = vmatprep.subr.mxu0 0.0
    %1722 = vmatpush1.msra.mxu0 %v1412
    %1723 = vmatprep.subr.mxu0 0.0
    %1724 = vmatpush1.msra.mxu0 %v1415
    %1725 = vmatprep.subr.mxu0 0.0
    %1726 = vmatpush1.msra.mxu0 %v1418
    %1727 = vmatprep.subr.mxu0 0.0
    %1728 = vmatpush1.msra.mxu0 %v1421
    %1729 = vmatprep.subr.mxu0 0.0
    %1730 = vmatpush1.msra.mxu0 %v1424
    %1731 = vmatprep.subr.mxu0 0.0
    %1732 = vmatpush1.msra.mxu0 %v1427
    %1733 = vmatprep.subr.mxu0 0.0
    %1734 = vmatpush1.msra.mxu0 %v1430
    %1735 = vmatprep.subr.mxu0 0.0
    %1736 = vmatpush1.msra.mxu0 %v1433
    %1737 = vmatprep.subr.mxu0 0.0
    %1738 = vmatpush1.msra.mxu0 %v1436
    %1739 = vmatprep.subr.mxu0 0.0
    %1740 = vmatpush1.msra.mxu0 %v1439
    %1741 = vmatprep.subr.mxu0 0.0
    %1742 = vmatpush1.msra.mxu0 %v1442
    %1743 = vmatprep.subr.mxu0 0.0
    %1744 = vmatpush1.msra.mxu0 %v1445
    %1745 = vmatprep.subr.mxu0 0.0
    %1746 = vmatpush1.msra.mxu0 %v1448
    %1747 = vmatprep.subr.mxu0 0.0
    %1748 = vmatpush1.msra.mxu0 %v1451
    %1749 = vmatprep.subr.mxu0 0.0
    %1750 = vmatpush1.msra.mxu0 %v1454
    %1751 = vmatprep.subr.mxu0 0.0
    %1752 = vmatpush1.msra.mxu0 %v1457
    %1753 = vmatprep.subr.mxu0 0.0
    %1754 = vmatpush1.msra.mxu0 %v1460
    %1755 = vmatprep.subr.mxu0 0.0
    %1756 = vmatpush1.msra.mxu0 %v1463
    %1757 = vmatprep.subr.mxu0 0.0
    %1758 = vmatpush1.msra.mxu0 %v1466
    %1759 = vmatprep.subr.mxu0 0.0
    %1760 = vmatpush1.msra.mxu0 %v1469
    %1761 = vmatprep.subr.mxu0 0.0
    %1762 = vmatpush1.msra.mxu0 %v1472
    %1763 = vmatprep.subr.mxu0 0.0
    %1764 = vmatpush1.msra.mxu0 %v1475
    %1765 = vmatprep.subr.mxu0 0.0
    %1766 = vmatpush1.msra.mxu0 %v1478
    %1767 = vmatprep.subr.mxu0 0.0
    %1768 = vmatpush1.msra.mxu0 %v1481
    %1769 = vmatprep.subr.mxu0 0.0
    %1770 = vmatpush1.msra.mxu0 %v1484
    %1771 = vmatprep.subr.mxu0 0.0
    %1772 = vmatpush1.msra.mxu0 %v1487
    %1773 = vmatprep.subr.mxu0 0.0
    %1774 = vmatpush1.msra.mxu0 %v1490
    %1775 = vmatprep.subr.mxu0 0.0
    %1776 = vmatpush1.msra.mxu0 %v1493
    %1777 = vmatprep.subr.mxu0 0.0
    %1778 = vmatpush1.msra.mxu0 %v1496
    %1779 = vmatprep.subr.mxu0 0.0
    %1780 = vmatpush1.msra.mxu0 %v1499
    %1781 = vmatprep.subr.mxu0 0.0
    %1782 = vmatpush1.msra.mxu0 %v1502
    %1783 = vmatprep.mubr.f32.mxu0 %v1304
    %1784 = vmatmul.mubr.f32.gmra.mrb[0].mxu0 %v1303
    %v1785 = vpop.f32.mrb[0].mxu0
    %v1786 = vadd.f32 %v1570, %v1785
    %v1787 = vpop.f32.mrb[0].mxu0
    %1788 = vdwg.mxu0
    %1789 = vmatprep.subr.mxu0 0.0
    %1790 = vmatpush1.msra.mxu0 %v1505
    %1791 = vmatprep.subr.mxu0 0.0
    %1792 = vmatpush1.msra.mxu0 %v1508
    %1793 = vmatprep.subr.mxu0 0.0
    %1794 = vmatpush1.msra.mxu0 %v1511
    %1795 = vmatprep.subr.mxu0 0.0
    %1796 = vmatpush1.msra.mxu0 %v1514
    %1797 = vmatprep.subr.mxu0 0.0
    %1798 = vmatpush1.msra.mxu0 %v1517
    %1799 = vmatprep.subr.mxu0 0.0
    %1800 = vmatpush1.msra.mxu0 %v1520
    %1801 = vmatprep.subr.mxu0 0.0
    %1802 = vmatpush1.msra.mxu0 %v1523
    %1803 = vmatprep.subr.mxu0 0.0
    %1804 = vmatpush1.msra.mxu0 %v1526
    %1805 = vmatprep.subr.mxu0 0.0
    %1806 = vmatpush1.msra.mxu0 %v1529
    %1807 = vmatprep.subr.mxu0 0.0
    %1808 = vmatpush1.msra.mxu0 %v1532
    %1809 = vmatprep.subr.mxu0 0.0
    %1810 = vmatpush1.msra.mxu0 %v1535
    %1811 = vmatprep.subr.mxu0 0.0
    %1812 = vmatpush1.msra.mxu0 %v1538
    %1813 = vmatprep.subr.mxu0 0.0
    %1814 = vmatpush1.msra.mxu0 %v1541
    %1815 = vmatprep.subr.mxu0 0.0
    %1816 = vmatpush1.msra.mxu0 %v1544
    %1817 = vmatprep.subr.mxu0 0.0
    %1818 = vmatpush1.msra.mxu0 %v1547
    %1819 = vmatprep.subr.mxu0 0.0
    %1820 = vmatpush1.msra.mxu0 %v1550
    %1821 = vmatprep.subr.mxu0 0.0
    %1822 = vmatpush1.msra.mxu0 %v1553
    %1823 = vmatprep.subr.mxu0 0.0
    %1824 = vmatpush1.msra.mxu0 %v1556
    %1825 = vmatprep.subr.mxu0 0.0
    %1826 = vmatpush1.msra.mxu0 0.0
    %1827 = vmatprep.subr.mxu0 0.0
    %1828 = vmatpush1.msra.mxu0 0.0
    %1829 = vmatprep.subr.mxu0 0.0
    %1830 = vmatpush1.msra.mxu0 0.0
    %1831 = vmatprep.subr.mxu0 0.0
    %1832 = vmatpush1.msra.mxu0 0.0
    %1833 = vmatprep.subr.mxu0 0.0
    %1834 = vmatpush1.msra.mxu0 0.0
    %1835 = vmatprep.subr.mxu0 0.0
    %1836 = vmatpush1.msra.mxu0 0.0
    %1837 = vmatprep.subr.mxu0 0.0
    %1838 = vmatpush1.msra.mxu0 0.0
    %1839 = vmatprep.subr.mxu0 0.0
    %1840 = vmatpush1.msra.mxu0 0.0
    %1841 = vmatprep.subr.mxu0 0.0
    %1842 = vmatpush1.msra.mxu0 0.0
    %1843 = vmatprep.subr.mxu0 0.0
    %1844 = vmatpush1.msra.mxu0 0.0
    %1845 = vmatprep.subr.mxu0 0.0
    %1846 = vmatpush1.msra.mxu0 0.0
    %1847 = vmatprep.subr.mxu0 0.0
    %1848 = vmatpush1.msra.mxu0 0.0
    %1849 = vmatprep.subr.mxu0 0.0
    %1850 = vmatpush1.msra.mxu0 0.0
    %1851 = vmatprep.subr.mxu0 0.0
    %1852 = vmatpush1.msra.mxu0 0.0
    %1853 = vmatprep.mubr.f32.mxu0 %v1575
    %1854 = vmatmul.mubr.f32.gmra.mrb[0].mxu0 %v1305
    %v1855 = vpop.f32.mrb[0].mxu0
    %v1856 = vadd.f32 %v1786, %v1855
    %v1857 = vpop.f32.mrb[0].mxu0
    %1858 = vdwg.mxu0
    %v1859 = vmax.f32 %v1715, 0.0
    %v1860 = vmax.f32 %v1717, 0.0
    %v1861 = vmax.f32 %v1856, 0.0
    %v1862 = vld [vmem:[%s7] sm:$0xf]
    %v1863 = vld [vmem:[%s7 + $0x4] sm:$0xf]
    %v1864 = vld [vmem:[%s7 + $0x8] sm:$0xf]
    %v1865 = vld [vmem:[%s7 + $0xc] sm:$0xf]
    %v1866 = vld [vmem:[%s7 + $0x10] sm:$0xf]
    %v1867 = vld [vmem:[%s7 + $0x14] sm:$0xf]
    %v1868 = vld [vmem:[%s7 + $0x18] sm:$0xf]
    %v1869 = vld [vmem:[%s7 + $0x1c] sm:$0xf]
    %v1870 = vld [vmem:[%s7 + $0x20] sm:$0xf]
    %v1871 = vld [vmem:[%s7 + $0x24] sm:$0xf]
    %v1872 = vld [vmem:[%s7 + $0x28] sm:$0xf]
    %v1873 = vld [vmem:[%s7 + $0x2c] sm:$0xf]
    %v1874 = vld [vmem:[%s7 + $0x30] sm:$0xf]
    %v1875 = vld [vmem:[%s7 + $0x34] sm:$0xf]
    %v1876 = vld [vmem:[%s7 + $0x38] sm:$0xf]
    %v1877 = vld [vmem:[%s7 + $0x3c] sm:$0xf]
    %v1878 = vld [vmem:[%s7 + $0x40] sm:$0xf]
    %v1879 = vld [vmem:[%s7 + $0x44] sm:$0xf]
    %v1880 = vld [vmem:[%s7 + $0x48] sm:$0xf]
    %v1881 = vld [vmem:[%s7 + $0x4c] sm:$0xf]
    %v1882 = vld [vmem:[%s7 + $0x50] sm:$0xf]
    %v1883 = vld [vmem:[%s7 + $0x54] sm:$0xf]
    %v1884 = vld [vmem:[%s7 + $0x58] sm:$0xf]
    %v1885 = vld [vmem:[%s7 + $0x5c] sm:$0xf]
    %v1886 = vld [vmem:[%s7 + $0x60] sm:$0xf]
    %v1887 = vld [vmem:[%s7 + $0x64] sm:$0xf]
    %v1888 = vld [vmem:[%s7 + $0x68] sm:$0xf]
    %v1889 = vld [vmem:[%s7 + $0x6c] sm:$0xf]
    %v1890 = vld [vmem:[%s7 + $0x70] sm:$0xf]
    %v1891 = vld [vmem:[%s7 + $0x74] sm:$0xf]
    %v1892 = vld [vmem:[%s7 + $0x78] sm:$0xf]
    %v1893 = vld [vmem:[%s7 + $0x7c] sm:$0xf]
    %v1894 = vld [vmem:[%s7 + $0x80] sm:$0xf]
    %v1895 = vld [vmem:[%s7 + $0x84] sm:$0xf]
    %v1896 = vld [vmem:[%s7 + $0x88] sm:$0xf]
    %v1897 = vld [vmem:[%s7 + $0x8c] sm:$0xf]
    %v1898 = vld [vmem:[%s7 + $0x90] sm:$0xf]
    %v1899 = vld [vmem:[%s7 + $0x94] sm:$0x3]
    %v1900 = vunpack.c.l.bf16 %v1862
    %v1901 = vunpack.c.l.bf16 %v1863
    %v1902 = vunpack.c.l.bf16 %v1864
    %v1903 = vunpack.c.l.bf16 %v1865
    %v1904 = vunpack.c.l.bf16 %v1866
    %v1905 = vunpack.c.l.bf16 %v1867
    %v1906 = vunpack.c.l.bf16 %v1868
    %v1907 = vunpack.c.l.bf16 %v1869
    %v1908 = vunpack.c.l.bf16 %v1870
    %v1909 = vunpack.c.l.bf16 %v1871
    %v1910 = vunpack.c.l.bf16 %v1872
    %v1911 = vunpack.c.l.bf16 %v1873
    %v1912 = vunpack.c.l.bf16 %v1874
    %v1913 = vunpack.c.l.bf16 %v1875
    %v1914 = vunpack.c.l.bf16 %v1876
    %v1915 = vunpack.c.l.bf16 %v1877
    %v1916 = vunpack.c.l.bf16 %v1878
    %v1917 = vunpack.c.l.bf16 %v1879
    %v1918 = vunpack.c.l.bf16 %v1880
    %v1919 = vunpack.c.l.bf16 %v1881
    %v1920 = vunpack.c.l.bf16 %v1882
    %v1921 = vunpack.c.l.bf16 %v1883
    %v1922 = vunpack.c.l.bf16 %v1884
    %v1923 = vunpack.c.l.bf16 %v1885
    %v1924 = vunpack.c.l.bf16 %v1886
    %v1925 = vunpack.c.l.bf16 %v1887
    %v1926 = vunpack.c.l.bf16 %v1888
    %v1927 = vunpack.c.l.bf16 %v1889
    %v1928 = vunpack.c.l.bf16 %v1890
    %v1929 = vunpack.c.l.bf16 %v1891
    %v1930 = vunpack.c.l.bf16 %v1892
    %v1931 = vunpack.c.l.bf16 %v1893
    %v1932 = vunpack.c.l.bf16 %v1894
    %v1933 = vunpack.c.l.bf16 %v1895
    %v1934 = vunpack.c.l.bf16 %v1896
    %v1935 = vunpack.c.l.bf16 %v1897
    %v1936 = vunpack.c.l.bf16 %v1898
    %v1937 = vunpack.c.l.bf16 %v1899
    %v1938 = vld [vmem:[%s13] sm:$0xf]
    %v1939 = vld [vmem:[%s13 + $0x4] sm:$0xf]
    %v1940 = vld [vmem:[%s13 + $0x8] sm:$0xf]
    %v1941 = vld [vmem:[%s13 + $0xc] sm:$0xf]
    %v1942 = vld [vmem:[%s13 + $0x10] sm:$0xf]
    %v1943 = vld [vmem:[%s13 + $0x14] sm:$0xf]
    %v1944 = vld [vmem:[%s13 + $0x18] sm:$0xf]
    %v1945 = vld [vmem:[%s13 + $0x1c] sm:$0xf]
    %v1946 = vld [vmem:[%s13 + $0x20] sm:$0xf]
    %v1947 = vld [vmem:[%s13 + $0x24] sm:$0xf]
    %v1948 = vld [vmem:[%s13 + $0x28] sm:$0xf]
    %v1949 = vld [vmem:[%s13 + $0x2c] sm:$0xf]
    %v1950 = vld [vmem:[%s13 + $0x30] sm:$0xf]
    %v1951 = vld [vmem:[%s13 + $0x34] sm:$0xf]
    %v1952 = vld [vmem:[%s13 + $0x38] sm:$0xf]
    %v1953 = vld [vmem:[%s13 + $0x3c] sm:$0xf]
    %v1954 = vld [vmem:[%s13 + $0x40] sm:$0xf]
    %v1955 = vld [vmem:[%s13 + $0x44] sm:$0xf]
    %v1956 = vld [vmem:[%s13 + $0x48] sm:$0xf]
    %v1957 = vld [vmem:[%s13 + $0x4c] sm:$0xf]
    %v1958 = vld [vmem:[%s13 + $0x50] sm:$0xf]
    %v1959 = vld [vmem:[%s13 + $0x54] sm:$0xf]
    %v1960 = vld [vmem:[%s13 + $0x58] sm:$0xf]
    %v1961 = vld [vmem:[%s13 + $0x5c] sm:$0xf]
    %v1962 = vld [vmem:[%s13 + $0x60] sm:$0xf]
    %v1963 = vld [vmem:[%s13 + $0x64] sm:$0xf]
    %v1964 = vld [vmem:[%s13 + $0x68] sm:$0xf]
    %v1965 = vld [vmem:[%s13 + $0x6c] sm:$0xf]
    %v1966 = vld [vmem:[%s13 + $0x70] sm:$0xf]
    %v1967 = vld [vmem:[%s13 + $0x74] sm:$0xf]
    %v1968 = vld [vmem:[%s13 + $0x78] sm:$0xf]
    %v1969 = vld [vmem:[%s13 + $0x7c] sm:$0xf]
    %v1970 = vld [vmem:[%s13 + $0x80] sm:$0xf]
    %v1971 = vld [vmem:[%s13 + $0x84] sm:$0xf]
    %v1972 = vld [vmem:[%s13 + $0x88] sm:$0xf]
    %v1973 = vld [vmem:[%s13 + $0x8c] sm:$0xf]
    %v1974 = vld [vmem:[%s13 + $0x90] sm:$0xf]
    %v1975 = vld [vmem:[%s13 + $0x94] sm:$0x3]
    %v1976 = vunpack.c.l.bf16 %v1938
    %v1977 = vunpack.c.l.bf16 %v1939
    %v1978 = vunpack.c.l.bf16 %v1940
    %v1979 = vunpack.c.l.bf16 %v1941
    %v1980 = vunpack.c.l.bf16 %v1942
    %v1981 = vunpack.c.l.bf16 %v1943
    %v1982 = vunpack.c.l.bf16 %v1944
    %v1983 = vunpack.c.l.bf16 %v1945
    %v1984 = vunpack.c.l.bf16 %v1946
    %v1985 = vunpack.c.l.bf16 %v1947
    %v1986 = vunpack.c.l.bf16 %v1948
    %v1987 = vunpack.c.l.bf16 %v1949
    %v1988 = vunpack.c.l.bf16 %v1950
    %v1989 = vunpack.c.l.bf16 %v1951
    %v1990 = vunpack.c.l.bf16 %v1952
    %v1991 = vunpack.c.l.bf16 %v1953
    %v1992 = vunpack.c.l.bf16 %v1954
    %v1993 = vunpack.c.l.bf16 %v1955
    %v1994 = vunpack.c.l.bf16 %v1956
    %v1995 = vunpack.c.l.bf16 %v1957
    %v1996 = vunpack.c.l.bf16 %v1958
    %v1997 = vunpack.c.l.bf16 %v1959
    %v1998 = vunpack.c.l.bf16 %v1960
    %v1999 = vunpack.c.l.bf16 %v1961
    %v2000 = vunpack.c.l.bf16 %v1962
    %v2001 = vunpack.c.l.bf16 %v1963
    %v2002 = vunpack.c.l.bf16 %v1964
    %v2003 = vunpack.c.l.bf16 %v1965
    %v2004 = vunpack.c.l.bf16 %v1966
    %v2005 = vunpack.c.l.bf16 %v1967
    %v2006 = vunpack.c.l.bf16 %v1968
    %v2007 = vunpack.c.l.bf16 %v1969
    %v2008 = vunpack.c.l.bf16 %v1970
    %v2009 = vunpack.c.l.bf16 %v1971
    %v2010 = vunpack.c.l.bf16 %v1972
    %v2011 = vunpack.c.l.bf16 %v1973
    %v2012 = vunpack.c.l.bf16 %v1974
    %v2013 = vunpack.c.l.bf16 %v1975
    %vm2014 = vcmask 359424
    %v2016 = vsel %vm2014, %v1861, 0
    %vm2018 = vcmask 1043456
    %v2020 = vsel %vm2018, %v2013, 0
    %2022 = vmatprep.subr.mxu0 0.0
    %2023 = vmatpush1.msra.mxu0 %v1976
    %2024 = vmatprep.subr.mxu0 0.0
    %2025 = vmatpush1.msra.mxu0 %v1977
    %2026 = vmatprep.subr.mxu0 0.0
    %2027 = vmatpush1.msra.mxu0 %v1978
    %2028 = vmatprep.subr.mxu0 0.0
    %2029 = vmatpush1.msra.mxu0 %v1979
    %2030 = vmatprep.subr.mxu0 0.0
    %2031 = vmatpush1.msra.mxu0 %v1980
    %2032 = vmatprep.subr.mxu0 0.0
    %2033 = vmatpush1.msra.mxu0 %v1981
    %2034 = vmatprep.subr.mxu0 0.0
    %2035 = vmatpush1.msra.mxu0 %v1982
    %2036 = vmatprep.subr.mxu0 0.0
    %2037 = vmatpush1.msra.mxu0 %v1983
    %2038 = vmatprep.subr.mxu0 0.0
    %2039 = vmatpush1.msra.mxu0 %v1984
    %2040 = vmatprep.subr.mxu0 0.0
    %2041 = vmatpush1.msra.mxu0 %v1985
    %2042 = vmatprep.subr.mxu0 0.0
    %2043 = vmatpush1.msra.mxu0 %v1986
    %2044 = vmatprep.subr.mxu0 0.0
    %2045 = vmatpush1.msra.mxu0 %v1987
    %2046 = vmatprep.subr.mxu0 0.0
    %2047 = vmatpush1.msra.mxu0 %v1988
    %2048 = vmatprep.subr.mxu0 0.0
    %2049 = vmatpush1.msra.mxu0 %v1989
    %2050 = vmatprep.subr.mxu0 0.0
    %2051 = vmatpush1.msra.mxu0 %v1990
    %2052 = vmatprep.subr.mxu0 0.0
    %2053 = vmatpush1.msra.mxu0 %v1991
    %2054 = vmatprep.subr.mxu0 0.0
    %2055 = vmatpush1.msra.mxu0 %v1992
    %2056 = vmatprep.subr.mxu0 0.0
    %2057 = vmatpush1.msra.mxu0 %v1993
    %2058 = vmatprep.subr.mxu0 0.0
    %2059 = vmatpush1.msra.mxu0 %v1994
    %2060 = vmatprep.subr.mxu0 0.0
    %2061 = vmatpush1.msra.mxu0 %v1995
    %2062 = vmatprep.subr.mxu0 0.0
    %2063 = vmatpush1.msra.mxu0 %v1996
    %2064 = vmatprep.subr.mxu0 0.0
    %2065 = vmatpush1.msra.mxu0 %v1997
    %2066 = vmatprep.subr.mxu0 0.0
    %2067 = vmatpush1.msra.mxu0 %v1998
    %2068 = vmatprep.subr.mxu0 0.0
    %2069 = vmatpush1.msra.mxu0 %v1999
    %2070 = vmatprep.subr.mxu0 0.0
    %2071 = vmatpush1.msra.mxu0 %v2000
    %2072 = vmatprep.subr.mxu0 0.0
    %2073 = vmatpush1.msra.mxu0 %v2001
    %2074 = vmatprep.subr.mxu0 0.0
    %2075 = vmatpush1.msra.mxu0 %v2002
    %2076 = vmatprep.subr.mxu0 0.0
    %2077 = vmatpush1.msra.mxu0 %v2003
    %2078 = vmatprep.subr.mxu0 0.0
    %2079 = vmatpush1.msra.mxu0 %v2004
    %2080 = vmatprep.subr.mxu0 0.0
    %2081 = vmatpush1.msra.mxu0 %v2005
    %2082 = vmatprep.subr.mxu0 0.0
    %2083 = vmatpush1.msra.mxu0 %v2006
    %2084 = vmatprep.subr.mxu0 0.0
    %2085 = vmatpush1.msra.mxu0 %v2007
    %2086 = vmatprep.mubr.f32.mxu0 %v1860
    %2087 = vmatmul.mubr.f32.gmra.mrb[0].mxu0 %v1859
    %v2088 = vpop.f32.mrb[0].mxu0
    %v2089 = vadd.f32 0.0, %v2088
    %v2090 = vpop.f32.mrb[0].mxu0
    %2091 = vdwg.mxu0
    %2092 = vmatprep.subr.mxu0 0.0
    %2093 = vmatpush1.msra.mxu0 %v2008
    %2094 = vmatprep.subr.mxu0 0.0
    %2095 = vmatpush1.msra.mxu0 %v2009
    %2096 = vmatprep.subr.mxu0 0.0
    %2097 = vmatpush1.msra.mxu0 %v2010
    %2098 = vmatprep.subr.mxu0 0.0
    %2099 = vmatpush1.msra.mxu0 %v2011
    %2100 = vmatprep.subr.mxu0 0.0
    %2101 = vmatpush1.msra.mxu0 %v2012
    %2102 = vmatprep.subr.mxu0 0.0
    %2103 = vmatpush1.msra.mxu0 %v2020
    %2104 = vmatprep.subr.mxu0 0.0
    %2105 = vmatpush1.msra.mxu0 0.0
    %2106 = vmatprep.subr.mxu0 0.0
    %2107 = vmatpush1.msra.mxu0 0.0
    %2108 = vmatprep.subr.mxu0 0.0
    %2109 = vmatpush1.msra.mxu0 0.0
    %2110 = vmatprep.subr.mxu0 0.0
    %2111 = vmatpush1.msra.mxu0 0.0
    %2112 = vmatprep.subr.mxu0 0.0
    %2113 = vmatpush1.msra.mxu0 0.0
    %2114 = vmatprep.subr.mxu0 0.0
    %2115 = vmatpush1.msra.mxu0 0.0
    %2116 = vmatprep.subr.mxu0 0.0
    %2117 = vmatpush1.msra.mxu0 0.0
    %2118 = vmatprep.subr.mxu0 0.0
    %2119 = vmatpush1.msra.mxu0 0.0
    %2120 = vmatprep.subr.mxu0 0.0
    %2121 = vmatpush1.msra.mxu0 0.0
    %2122 = vmatprep.subr.mxu0 0.0
    %2123 = vmatpush1.msra.mxu0 0.0
    %2124 = vmatprep.subr.mxu0 0.0
    %2125 = vmatpush1.msra.mxu0 0.0
    %2126 = vmatprep.subr.mxu0 0.0
    %2127 = vmatpush1.msra.mxu0 0.0
    %2128 = vmatprep.subr.mxu0 0.0
    %2129 = vmatpush1.msra.mxu0 0.0
    %2130 = vmatprep.subr.mxu0 0.0
    %2131 = vmatpush1.msra.mxu0 0.0
    %2132 = vmatprep.subr.mxu0 0.0
    %2133 = vmatpush1.msra.mxu0 0.0
    %2134 = vmatprep.subr.mxu0 0.0
    %2135 = vmatpush1.msra.mxu0 0.0
    %2136 = vmatprep.subr.mxu0 0.0
    %2137 = vmatpush1.msra.mxu0 0.0
    %2138 = vmatprep.subr.mxu0 0.0
    %2139 = vmatpush1.msra.mxu0 0.0
    %2140 = vmatprep.subr.mxu0 0.0
    %2141 = vmatpush1.msra.mxu0 0.0
    %2142 = vmatprep.subr.mxu0 0.0
    %2143 = vmatpush1.msra.mxu0 0.0
    %2144 = vmatprep.subr.mxu0 0.0
    %2145 = vmatpush1.msra.mxu0 0.0
    %2146 = vmatprep.subr.mxu0 0.0
    %2147 = vmatpush1.msra.mxu0 0.0
    %2148 = vmatprep.subr.mxu0 0.0
    %2149 = vmatpush1.msra.mxu0 0.0
    %2150 = vmatprep.subr.mxu0 0.0
    %2151 = vmatpush1.msra.mxu0 0.0
    %2152 = vmatprep.subr.mxu0 0.0
    %2153 = vmatpush1.msra.mxu0 0.0
    %2154 = vmatprep.subr.mxu0 0.0
    %2155 = vmatpush1.msra.mxu0 0.0
    %2156 = vmatprep.mubr.f32.mxu0 0.0
    %2157 = vmatmul.mubr.f32.gmra.mrb[0].mxu0 %v2016
    %v2158 = vpop.f32.mrb[0].mxu0
    %v2159 = vadd.f32 %v2089, %v2158
    %v2160 = vpop.f32.mrb[0].mxu0
    %2161 = vdwg.mxu0
    %v2163 = vsel %vm2014, %v974, 0
    %v2166 = vsel %vm2018, %v1937, 0
    %2168 = vmatprep.subr.mxu0 0.0
    %2169 = vmatpush1.msra.mxu0 %v1900
    %2170 = vmatprep.subr.mxu0 0.0
    %2171 = vmatpush1.msra.mxu0 %v1901
    %2172 = vmatprep.subr.mxu0 0.0
    %2173 = vmatpush1.msra.mxu0 %v1902
    %2174 = vmatprep.subr.mxu0 0.0
    %2175 = vmatpush1.msra.mxu0 %v1903
    %2176 = vmatprep.subr.mxu0 0.0
    %2177 = vmatpush1.msra.mxu0 %v1904
    %2178 = vmatprep.subr.mxu0 0.0
    %2179 = vmatpush1.msra.mxu0 %v1905
    %2180 = vmatprep.subr.mxu0 0.0
    %2181 = vmatpush1.msra.mxu0 %v1906
    %2182 = vmatprep.subr.mxu0 0.0
    %2183 = vmatpush1.msra.mxu0 %v1907
    %2184 = vmatprep.subr.mxu0 0.0
    %2185 = vmatpush1.msra.mxu0 %v1908
    %2186 = vmatprep.subr.mxu0 0.0
    %2187 = vmatpush1.msra.mxu0 %v1909
    %2188 = vmatprep.subr.mxu0 0.0
    %2189 = vmatpush1.msra.mxu0 %v1910
    %2190 = vmatprep.subr.mxu0 0.0
    %2191 = vmatpush1.msra.mxu0 %v1911
    %2192 = vmatprep.subr.mxu0 0.0
    %2193 = vmatpush1.msra.mxu0 %v1912
    %2194 = vmatprep.subr.mxu0 0.0
    %2195 = vmatpush1.msra.mxu0 %v1913
    %2196 = vmatprep.subr.mxu0 0.0
    %2197 = vmatpush1.msra.mxu0 %v1914
    %2198 = vmatprep.subr.mxu0 0.0
    %2199 = vmatpush1.msra.mxu0 %v1915
    %2200 = vmatprep.subr.mxu0 0.0
    %2201 = vmatpush1.msra.mxu0 %v1916
    %2202 = vmatprep.subr.mxu0 0.0
    %2203 = vmatpush1.msra.mxu0 %v1917
    %2204 = vmatprep.subr.mxu0 0.0
    %2205 = vmatpush1.msra.mxu0 %v1918
    %2206 = vmatprep.subr.mxu0 0.0
    %2207 = vmatpush1.msra.mxu0 %v1919
    %2208 = vmatprep.subr.mxu0 0.0
    %2209 = vmatpush1.msra.mxu0 %v1920
    %2210 = vmatprep.subr.mxu0 0.0
    %2211 = vmatpush1.msra.mxu0 %v1921
    %2212 = vmatprep.subr.mxu0 0.0
    %2213 = vmatpush1.msra.mxu0 %v1922
    %2214 = vmatprep.subr.mxu0 0.0
    %2215 = vmatpush1.msra.mxu0 %v1923
    %2216 = vmatprep.subr.mxu0 0.0
    %2217 = vmatpush1.msra.mxu0 %v1924
    %2218 = vmatprep.subr.mxu0 0.0
    %2219 = vmatpush1.msra.mxu0 %v1925
    %2220 = vmatprep.subr.mxu0 0.0
    %2221 = vmatpush1.msra.mxu0 %v1926
    %2222 = vmatprep.subr.mxu0 0.0
    %2223 = vmatpush1.msra.mxu0 %v1927
    %2224 = vmatprep.subr.mxu0 0.0
    %2225 = vmatpush1.msra.mxu0 %v1928
    %2226 = vmatprep.subr.mxu0 0.0
    %2227 = vmatpush1.msra.mxu0 %v1929
    %2228 = vmatprep.subr.mxu0 0.0
    %2229 = vmatpush1.msra.mxu0 %v1930
    %2230 = vmatprep.subr.mxu0 0.0
    %2231 = vmatpush1.msra.mxu0 %v1931
    %2232 = vmatprep.mubr.f32.mxu0 %v973
    %2233 = vmatmul.mubr.f32.gmra.mrb[0].mxu0 %v972
    %v2234 = vpop.f32.mrb[0].mxu0
    %v2235 = vadd.f32 %v2159, %v2234
    %v2236 = vpop.f32.mrb[0].mxu0
    %2237 = vdwg.mxu0
    %2238 = vmatprep.subr.mxu0 0.0
    %2239 = vmatpush1.msra.mxu0 %v1932
    %2240 = vmatprep.subr.mxu0 0.0
    %2241 = vmatpush1.msra.mxu0 %v1933
    %2242 = vmatprep.subr.mxu0 0.0
    %2243 = vmatpush1.msra.mxu0 %v1934
    %2244 = vmatprep.subr.mxu0 0.0
    %2245 = vmatpush1.msra.mxu0 %v1935
    %2246 = vmatprep.subr.mxu0 0.0
    %2247 = vmatpush1.msra.mxu0 %v1936
    %2248 = vmatprep.subr.mxu0 0.0
    %2249 = vmatpush1.msra.mxu0 %v2166
    %2250 = vmatprep.subr.mxu0 0.0
    %2251 = vmatpush1.msra.mxu0 0.0
    %2252 = vmatprep.subr.mxu0 0.0
    %2253 = vmatpush1.msra.mxu0 0.0
    %2254 = vmatprep.subr.mxu0 0.0
    %2255 = vmatpush1.msra.mxu0 0.0
    %2256 = vmatprep.subr.mxu0 0.0
    %2257 = vmatpush1.msra.mxu0 0.0
    %2258 = vmatprep.subr.mxu0 0.0
    %2259 = vmatpush1.msra.mxu0 0.0
    %2260 = vmatprep.subr.mxu0 0.0
    %2261 = vmatpush1.msra.mxu0 0.0
    %2262 = vmatprep.subr.mxu0 0.0
    %2263 = vmatpush1.msra.mxu0 0.0
    %2264 = vmatprep.subr.mxu0 0.0
    %2265 = vmatpush1.msra.mxu0 0.0
    %2266 = vmatprep.subr.mxu0 0.0
    %2267 = vmatpush1.msra.mxu0 0.0
    %2268 = vmatprep.subr.mxu0 0.0
    %2269 = vmatpush1.msra.mxu0 0.0
    %2270 = vmatprep.subr.mxu0 0.0
    %2271 = vmatpush1.msra.mxu0 0.0
    %2272 = vmatprep.subr.mxu0 0.0
    %2273 = vmatpush1.msra.mxu0 0.0
    %2274 = vmatprep.subr.mxu0 0.0
    %2275 = vmatpush1.msra.mxu0 0.0
    %2276 = vmatprep.subr.mxu0 0.0
    %2277 = vmatpush1.msra.mxu0 0.0
    %2278 = vmatprep.subr.mxu0 0.0
    %2279 = vmatpush1.msra.mxu0 0.0
    %2280 = vmatprep.subr.mxu0 0.0
    %2281 = vmatpush1.msra.mxu0 0.0
    %2282 = vmatprep.subr.mxu0 0.0
    %2283 = vmatpush1.msra.mxu0 0.0
    %2284 = vmatprep.subr.mxu0 0.0
    %2285 = vmatpush1.msra.mxu0 0.0
    %2286 = vmatprep.subr.mxu0 0.0
    %2287 = vmatpush1.msra.mxu0 0.0
    %2288 = vmatprep.subr.mxu0 0.0
    %2289 = vmatpush1.msra.mxu0 0.0
    %2290 = vmatprep.subr.mxu0 0.0
    %2291 = vmatpush1.msra.mxu0 0.0
    %2292 = vmatprep.subr.mxu0 0.0
    %2293 = vmatpush1.msra.mxu0 0.0
    %2294 = vmatprep.subr.mxu0 0.0
    %2295 = vmatpush1.msra.mxu0 0.0
    %2296 = vmatprep.subr.mxu0 0.0
    %2297 = vmatpush1.msra.mxu0 0.0
    %2298 = vmatprep.subr.mxu0 0.0
    %2299 = vmatpush1.msra.mxu0 0.0
    %2300 = vmatprep.subr.mxu0 0.0
    %2301 = vmatpush1.msra.mxu0 0.0
    %2302 = vmatprep.mubr.f32.mxu0 0.0
    %2303 = vmatmul.mubr.f32.gmra.mrb[0].mxu0 %v2163
    %v2304 = vpop.f32.mrb[0].mxu0
    %v2305 = vadd.f32 %v2235, %v2304
    %v2306 = vpop.f32.mrb[0].mxu0
    %2307 = vdwg.mxu0
    %v2308 = vld [vmem:[%s14] sm:$0x1]
    %v2310 = vlaneseq
    %v2311 = vshrl.u32 %v2310, 7
    %v2312 = vsub.s32 0, %v2311
    %v2313 = vrot.slane %v2308, %v2312
    %v2315 = vadd.f32 %v2305, %v2313
    %vm2316 = vcmask 11264
    %2317 = vst.msk [vmem:[%s15] sm:$0xf] %vm2316, %v2315
    // Predicated region
    $region70: #{tpu_custom_call.1} parent=1 // pred_check
      _
    $region71: #{tpu_custom_call.1} parent=1 // pred_check_branch
      %2319 = sbr.rel (0) target = $region73
    $region72: #{tpu_custom_call.1} parent=1 // pred_region
      _
    $region73: #{tpu_custom_call.1} parent=1 // pred_fallthru
      _
    // Predicated region
    $region74: #{tpu_custom_call.1} parent=1 // pred_check
      _
    $region75: #{tpu_custom_call.1} parent=1 // pred_check_branch
      %2321 = sbr.rel (0) target = $region77
    $region76: #{tpu_custom_call.1} parent=1 // pred_region
      _
    $region77: #{tpu_custom_call.1} parent=1 // pred_fallthru
      _
    %2322 = vsyncpa [#allocation3], 1
    %2323 = vsyncpa [#allocation5], 1

</llo_original>
